<compile_context>
chip_gen: v7x
topology: tpu7x:2x2x1
jax: 0.10.0
libtpu: 0.0.40
codegen_flags: <defaults>
</compile_context>

<pallas_src>
import math

import jax
import jax.numpy as jnp
from jax import lax
from jax.experimental import pallas as pl
from jax.experimental.pallas import tpu as pltpu

BN_EPS = 1e-5
LANE = 128


def _vmem_capacity_bytes():
    try:
        info = pltpu.get_tpu_info()
        for name in ("vmem_capacity_bytes", "vmem_size_bytes", "vmem_bytes"):
            cap = getattr(info, name, None)
            if cap:
                return int(cap)
    except Exception:
        pass
    return 64 * 1024 * 1024  # conservative default = v7x per-TensorCore VMEM


def _choose_tiles(n, c, hw, itemsize, budget):
    """Pick (tc, thw) channel / spatial tile sizes for the pooling kernel."""

    def per_row(thw):
        # VMEM bytes per (sample, channel) row of one grid step:
        #   double-buffered feature tile + f32 [.,.,128] acc scratch + dbl-buf f32 out
        return 2 * thw * itemsize + LANE * 4 + 2 * 4

    # (a) whole feature map as a single block.
    if n * c * per_row(hw) <= budget:
        return c, hw

    # (c) channel tiling, full spatial extent per block (long contiguous DMA runs);
    #     tc must be a multiple of 128 for a lane-dense pooled output.
    tc_c = 0
    if c >= LANE:
        tc_c = min((budget // (n * per_row(hw))) // LANE * LANE, (c // LANE) * LANE)

    # (b) full channels, spatial tiling (thw multiple of 128).
    thw_b = 0
    if hw >= LANE:
        row_budget = budget // (n * c)
        if row_budget > LANE * 4 + 8:
            thw_b = min(((row_budget - LANE * 4 - 8) // (2 * itemsize)) // LANE * LANE,
                        (hw // LANE) * LANE)

    small_spatial = hw * itemsize <= 4096
    if tc_c >= LANE and (small_spatial or thw_b < LANE):
        return tc_c, hw
    if thw_b >= LANE:
        return c, thw_b
    if tc_c >= LANE:
        return tc_c, hw

    # (d) tile both dims at lane-aligned minima.
    # TODO(synk): extremely large batch sizes can still exceed the VMEM budget here.
    tc_d = max(LANE, (budget // (n * per_row(LANE))) // LANE * LANE)
    tc_d = min(tc_d, (c // LANE) * LANE) if c >= LANE else c
    thw_d = LANE if hw >= LANE else hw
    return tc_d, thw_d


def base_classifier_forward(feature, w, b, gamma, beta, *, tile_c=None, tile_hw=None):
    """feature: [N, C, H, W] backbone feature map; w: [nattr, C]; b/gamma/beta: [nattr]."""
    n, c, h, wd = feature.shape
    hw = h * wd
    nattr = w.shape[0]
    a_pad = pl.cdiv(nattr, LANE) * LANE
    itemsize = jnp.dtype(feature.dtype).itemsize

    # ---- per-generation VMEM budgets: v5e/v6e have 128 MiB, v7x 64 MiB per TC ----
    if _vmem_capacity_bytes() >= 100 * 1024 * 1024:
        feat_budget, vmem_limit = 40 * 1024 * 1024, 96 * 1024 * 1024
    else:
        feat_budget, vmem_limit = 20 * 1024 * 1024, 48 * 1024 * 1024

    tc, thw = _choose_tiles(n, c, hw, itemsize, feat_budget)
    if tile_c is not None:
        tc = min(tile_c, c)
    if tile_hw is not None:
        thw = min(tile_hw, hw)
    assert tc == c or tc % LANE == 0, "channel tile must be 128-aligned or full"
    assert thw == hw or thw % LANE == 0, "spatial tile must be 128-aligned or full"

    n_c = pl.cdiv(c, tc)
    n_hw = pl.cdiv(hw, thw)
    c_out = n_c * tc

    mask_hw = (n_hw > 1) and (hw % thw != 0)   # ragged spatial tail
    mask_c = (c % tc != 0)                     # ragged channel tail

    feat3 = feature.reshape(n, c, hw)          # metadata-only reshape; NO padding copy

    # ---------------- Kernel A: streamed spatial-sum pooling ----------------
    def pool_kernel(feat_ref, out_ref, acc_ref):
        ci = pl.program_id(0)
        k = pl.program_id(1)

        tile = feat_ref[...].astype(jnp.float32)             # [n, tc, thw]

        if mask_hw:
            valid = hw - k * thw                              # >= thw except last step
            col = lax.broadcasted_iota(jnp.int32, (1, 1, thw), 2)
            tile = jnp.where(col < valid, tile, 0.0)
        if mask_c:
            valid_c = c - ci * tc
            row = lax.broadcasted_iota(jnp.int32, (1, tc, 1), 1)
            tile = jnp.where(row < valid_c, tile, 0.0)

        if n_hw == 1:
            # single spatial step: reduce straight into the output block
            out_ref[...] = jnp.sum(tile, axis=-1)
        else:
            @pl.when(k == 0)
            def _init():
                acc_ref[...] = jnp.zeros_like(acc_ref)

            # pure VPU lane-block adds; the cross-lane reduce only runs in the epilogue
            part = tile[:, :, 0:LANE]
            for j in range(1, thw // LANE):
                part = part + tile[:, :, j * LANE:(j + 1) * LANE]
            acc_ref[...] += part

            @pl.when(k == n_hw - 1)
            def _epilogue():
                out_ref[...] = jnp.sum(acc_ref[...], axis=-1)

    pooled = pl.pallas_call(
        pool_kernel,
        out_shape=jax.ShapeDtypeStruct((n, c_out), jnp.float32),
        grid_spec=pltpu.PrefetchScalarGridSpec(
            num_scalar_prefetch=0,
            grid=(n_c, n_hw),
            in_specs=[pl.BlockSpec((n, tc, thw), lambda ci, k: (0, ci, k))],
            out_specs=pl.BlockSpec((n, tc), lambda ci, k: (0, ci)),
            scratch_shapes=[pltpu.VMEM((n, tc, LANE), jnp.float32)],
        ),
        compiler_params=pltpu.CompilerParams(
            # channel tiles are independent -> megacore may split them (v7x);
            # the spatial axis carries the accumulator -> arbitrary.
            dimension_semantics=("parallel", "arbitrary"),
            vmem_limit_bytes=vmem_limit,
        ),
        cost_estimate=pl.CostEstimate(
            flops=n * c * hw,
            transcendentals=0,
            bytes_accessed=n * c * hw * itemsize + n * c_out * 4,
        ),
    )(feat3)

    # ---------------- Kernel B: Linear + BatchNorm1d head (tiny, resident) ----------------
    # 1/HW folded into the weight (pooled sums -> means); zero rows for ghost channels;
    # attribute dim padded to 128 so the epilogue / output store are lane-dense.
    w_t = jnp.zeros((c_out, a_pad), jnp.float32).at[:c, :nattr].set(
        jnp.transpose(w).astype(jnp.float32) / float(hw))
    b2 = jnp.zeros((1, a_pad), jnp.float32).at[:, :nattr].set(b.astype(jnp.float32))
    g2 = jnp.ones((1, a_pad), jnp.float32).at[:, :nattr].set(gamma.astype(jnp.float32))
    be2 = jnp.zeros((1, a_pad), jnp.float32).at[:, :nattr].set(beta.astype(jnp.float32))

    def head_kernel(pooled_ref, w_ref, b_ref, g_ref, be_ref, out_ref):
        x = jnp.dot(pooled_ref[...], w_ref[...],
                    preferred_element_type=jnp.float32,
                    precision=lax.Precision.HIGHEST) + b_ref[...]     # [n, a_pad]
        # BatchNorm1d, training-mode batch statistics (biased variance over N)
        mean = jnp.mean(x, axis=0, keepdims=True)
        diff = x - mean
        var = jnp.mean(diff * diff, axis=0, keepdims=True)
        inv_std = lax.rsqrt(var + BN_EPS)
        out_ref[...] = g_ref[...] * diff * inv_std + be_ref[...]

    out = pl.pallas_call(
        head_kernel,
        out_shape=jax.ShapeDtypeStruct((n, a_pad), jnp.float32),
    )(pooled, w_t, b2, g2, be2)

    return out[:, :nattr]


if __name__ == "__main__":
    # Small feat_map consistent with the module: C backbone channels, NATTR attributes.
    N, C, H, W = 4, 192, 20, 20          # H*W = 400
    NATTR = 8

    key = jax.random.PRNGKey(0)
    k_feat, k_w, k_b = jax.random.split(key, 3)

    feature = jax.random.normal(k_feat, (N, C, H, W), dtype=jnp.float32)

    # nn.Linear(C, NATTR) + nn.BatchNorm1d(NATTR) style deterministic init.
    bound = 1.0 / math.sqrt(C)
    w = jax.random.uniform(k_w, (NATTR, C), minval=-bound, maxval=bound, dtype=jnp.float32)
    b = jax.random.uniform(k_b, (NATTR,), minval=-bound, maxval=bound, dtype=jnp.float32)
    gamma = jnp.ones((NATTR,), dtype=jnp.float32)
    beta = jnp.zeros((NATTR,), dtype=jnp.float32)

    # Forced small tiles: C=192 -> 2 channel tiles (ragged last), HW=400 -> 2 spatial
    # tiles (ragged last).  Exercises the pipelined accumulator, both in-kernel tail
    # masks, and the parallel channel axis.
    out = base_classifier_forward(feature, w, b, gamma, beta, tile_c=128, tile_hw=256)
    out = jax.block_until_ready(out)

    # Pure-JAX reference: avg-pool -> Linear -> train-mode BatchNorm1d.
    pooled_ref = feature.reshape(N, C, H * W).mean(-1)
    x_ref = jnp.dot(pooled_ref, w.T, precision=jax.lax.Precision.HIGHEST) + b
    m = x_ref.mean(0, keepdims=True)
    v = ((x_ref - m) ** 2).mean(0, keepdims=True)
    ref = gamma * (x_ref - m) / jnp.sqrt(v + BN_EPS) + beta

    assert out.shape == (N, NATTR)
    err = float(jnp.abs(out - ref).max())
    assert jnp.allclose(out, ref, atol=1e-3, rtol=1e-3), err

    print("KERNEL_OK")
</pallas_src>

<mosaic_0001>
module attributes {stable_mosaic.version = 11 : i64} {
  func.func @pool_kernel(%arg0: i32, %arg1: i32, %arg2: memref<4x128x256xf32, #tpu.memory_space<vmem>>, %arg3: memref<4x128xf32, #tpu.memory_space<vmem>>, %arg4: memref<4x128x128xf32, #tpu.memory_space<vmem>>) attributes {dimension_semantics = [#tpu.dimension_semantics<parallel>, #tpu.dimension_semantics<arbitrary>], iteration_bounds = array<i64: 2, 2>, scalar_prefetch = 0 : i64, scratch_operands = 1 : i64, tpu.core_type = #tpu.core_type<tc>, window_params = [{transform_indices = @transform_0, window_bounds = array<i64: 4, 128, 256>}, {transform_indices = @transform_1, window_bounds = array<i64: 4, 128>}]} {
    %c0 = arith.constant 0 : index
    %c0_0 = arith.constant 0 : index
    %c0_1 = arith.constant 0 : index
    %0 = vector.load %arg2[%c0, %c0_0, %c0_1] : memref<4x128x256xf32, #tpu.memory_space<vmem>>, vector<4x128x256xf32>
    %c256_i32 = arith.constant 256 : i32
    %1 = arith.muli %arg1, %c256_i32 : i32
    %c400_i32 = arith.constant 400 : i32
    %2 = arith.subi %c400_i32, %1 : i32
    %3 = tpu.iota {dimensions = array<i32: 2>} : vector<1x1x256xi32>
    %4 = vector.broadcast %2 : i32 to vector<1x1x256xi32>
    %5 = arith.cmpi slt, %3, %4 : vector<1x1x256xi32>
    %cst = arith.constant 0.000000e+00 : f32
    %6 = vector.shape_cast %5 : vector<1x1x256xi1> to vector<1x1x256xi1>
    %7 = vector.broadcast %6 : vector<1x1x256xi1> to vector<4x128x256xi1>
    %8 = vector.broadcast %cst : f32 to vector<4x128x256xf32>
    %9 = arith.select %7, %0, %8 : vector<4x128x256xi1>, vector<4x128x256xf32>
    %c128_i32 = arith.constant 128 : i32
    %10 = arith.muli %arg0, %c128_i32 : i32
    %c192_i32 = arith.constant 192 : i32
    %11 = arith.subi %c192_i32, %10 : i32
    %12 = tpu.iota {dimensions = array<i32: 1>} : vector<1x128x1xi32>
    %13 = vector.broadcast %11 : i32 to vector<1x128x1xi32>
    %14 = arith.cmpi slt, %12, %13 : vector<1x128x1xi32>
    %cst_2 = arith.constant 0.000000e+00 : f32
    %15 = vector.shape_cast %14 : vector<1x128x1xi1> to vector<1x128x1xi1>
    %16 = vector.broadcast %15 : vector<1x128x1xi1> to vector<4x128x256xi1>
    %17 = vector.broadcast %cst_2 : f32 to vector<4x128x256xf32>
    %18 = arith.select %16, %9, %17 : vector<4x128x256xi1>, vector<4x128x256xf32>
    %c0_i32 = arith.constant 0 : i32
    %19 = arith.cmpi eq, %arg1, %c0_i32 : i32
    %20 = arith.extui %19 : i1 to i32
    %c0_i32_3 = arith.constant 0 : i32
    %21 = arith.cmpi ne, %20, %c0_i32_3 : i32
    scf.if %21 {
      %cst_11 = arith.constant 0.000000e+00 : f32
      %31 = vector.broadcast %cst_11 : f32 to vector<4x128x128xf32>
      %c0_12 = arith.constant 0 : index
      %c0_13 = arith.constant 0 : index
      %c0_14 = arith.constant 0 : index
      %32 = vector.load %arg4[%c0_12, %c0_13, %c0_14] : memref<4x128x128xf32, #tpu.memory_space<vmem>>, vector<4x128x128xf32>
      tpu.vector_store %arg4[%c0_12, %c0_13, %c0_14], %31 {strides = array<i32>} : memref<4x128x128xf32, #tpu.memory_space<vmem>>, vector<4x128x128xf32>,
    } else {
    }
    %22 = vector.extract_strided_slice %18 {offsets = [0, 0, 0], sizes = [4, 128, 128], strides = [1, 1, 1]} : vector<4x128x256xf32> to vector<4x128x128xf32>
    %23 = vector.extract_strided_slice %18 {offsets = [0, 0, 128], sizes = [4, 128, 128], strides = [1, 1, 1]} : vector<4x128x256xf32> to vector<4x128x128xf32>
    %24 = arith.addf %22, %23 : vector<4x128x128xf32>
    %c0_4 = arith.constant 0 : index
    %c0_5 = arith.constant 0 : index
    %c0_6 = arith.constant 0 : index
    %25 = vector.load %arg4[%c0_4, %c0_5, %c0_6] : memref<4x128x128xf32, #tpu.memory_space<vmem>>, vector<4x128x128xf32>
    %26 = arith.addf %25, %24 : vector<4x128x128xf32>
    %c0_7 = arith.constant 0 : index
    %c0_8 = arith.constant 0 : index
    %c0_9 = arith.constant 0 : index
    %27 = vector.load %arg4[%c0_7, %c0_8, %c0_9] : memref<4x128x128xf32, #tpu.memory_space<vmem>>, vector<4x128x128xf32>
    tpu.vector_store %arg4[%c0_7, %c0_8, %c0_9], %26 {strides = array<i32>} : memref<4x128x128xf32, #tpu.memory_space<vmem>>, vector<4x128x128xf32>,
    %c1_i32 = arith.constant 1 : i32
    %28 = arith.cmpi eq, %arg1, %c1_i32 : i32
    %29 = arith.extui %28 : i1 to i32
    %c0_i32_10 = arith.constant 0 : i32
    %30 = arith.cmpi ne, %29, %c0_i32_10 : i32
    scf.if %30 {
      %c0_11 = arith.constant 0 : index
      %c0_12 = arith.constant 0 : index
      %c0_13 = arith.constant 0 : index
      %31 = vector.load %arg4[%c0_11, %c0_12, %c0_13] : memref<4x128x128xf32, #tpu.memory_space<vmem>>, vector<4x128x128xf32>
      %cst_14 = arith.constant dense<0.000000e+00> : vector<4x128xf32>
      %32 = vector.multi_reduction <add>, %31, %cst_14 [2] : vector<4x128x128xf32> to vector<4x128xf32>
      %c0_15 = arith.constant 0 : index
      %c0_16 = arith.constant 0 : index
      %33 = vector.load %arg3[%c0_15, %c0_16] : memref<4x128xf32, #tpu.memory_space<vmem>>, vector<4x128xf32>
      tpu.vector_store %arg3[%c0_15, %c0_16], %32 {strides = array<i32>} : memref<4x128xf32, #tpu.memory_space<vmem>>, vector<4x128xf32>,
    } else {
    }
    return
  }
  func.func @transform_0(%arg0: i32, %arg1: i32) -> (i32, i32, i32) {
    %c0_i32 = arith.constant 0 : i32
    %c0_i32_0 = arith.constant 0 : i32
    return %c0_i32, %arg0, %arg1 : i32, i32, i32
  }
  func.func @transform_1(%arg0: i32, %arg1: i32) -> (i32, i32) {
    %c0_i32 = arith.constant 0 : i32
    %c0_i32_0 = arith.constant 0 : i32
    return %c0_i32, %arg0 : i32, i32
  }
}

</mosaic_0001>

<llo_original>
// kernel: tpu_custom_call.1
$region0: #{tpu_custom_call.1}
  #allocation0 [shape = 'u32[]', space=smem, size = 0x4, offset = 0x4, fixed_abs, tag = 'smem constant byte address 0x4 - core index']
  #allocation1 [shape = 'u32[144,128]{1,0:T(1,128)}', space=vmem, size = 0x12000, scoped, tag = 'internal scratch']
  #allocation2 [shape = 'f32[4,128,128]{2,1,0:T(8,128)}', space=vmem, size = 0x40000, scoped, tag = 'scratch operand']
  #allocation7 [shape = 's32[]', space=sflag, size = 0x4, offset = 0, fixed_abs, tag = 'sflag constant byte address 0x0 - dummy sync flag']
  %s0 = inlined_call_operand.hbm [shape: f32[4,192,400], index: 0, kind: input, shape index: {}]
  %s1 = inlined_call_operand.hbm [shape: f32[4,256], index: 1, kind: output, shape index: {}]
  %s2 = sld [smem:[#allocation0]]
  $region49: #{tpu_custom_call.1} parent=0
    _
  %s4 = ssub.s32 1, %s2
  %s5 = scalar_select 0, %s4, %s2
  $region1: #{tpu_custom_call.1} parent=0
    #allocation3 [shape = 'u8[1048576]{0}', space=vmem, size = 0x100000, scoped, tag = 'input window, operand 0']
    #allocation4 [shape = 's32[2]{0}', space=sflag, size = 0x8, scoped, tag = 'scoped memory for tpu_custom_call.1']
    #allocation5 [shape = 's32[2]{0}', space=sflag, size = 0x8, scoped, tag = 'scoped memory for tpu_custom_call.1']
    #allocation6 [shape = 'u8[4096]{0}', space=vmem, size = 0x1000, scoped, tag = 'output window, operand 0']
    %6 = vsyncpa [#allocation4], 0
    %s7 = scalar_lea.sflag [#allocation4], 1
    %8 = vsyncpa %s7, 0
    %9 = vsyncpa [#allocation5], 0
    %s10 = scalar_lea.sflag [#allocation5], 1
    %11 = vsyncpa %s10, 0
    loop: start=0, step=1, limit=6
    $region2: #{tpu_custom_call.1} parent=1 // loop_pre_header
      _
    $region3: #{tpu_custom_call.1} parent=1 // loop_header
      %s13 = sphi 0, %s17
      %p14 = scmp.ge.s32.totalorder %s13, 6
      %s20 = sphi 0, %s32
      %s21 = sphi 0, %s28
      %s22 = sphi 0, %s20
      %s23 = sphi 0, %s21
      %s24 = sphi 0, %s22
      %s25 = sphi 0, %s23
      %s37 = sphi 0, %s39
      %s40 = sphi 0, %s37
      %s41 = sphi 0, %s40
      %s57 = sphi 0, %s41
      %s63 = sphi 0, %s65
      %s66 = sphi 0, %s63
      %s67 = sphi 0, %s66
      %s83 = sphi 0, %s67
    $region4: #{tpu_custom_call.1} parent=1 // loop_header_branch
      %16 = sbr.rel (%p14) target = $region8
    $region5: #{tpu_custom_call.1} parent=1 // loop_body
      %s18 = ssub.s32 %s13, 1
      %s19 = ssub.s32 %s13, 2
      %s26 = sadd.s32 1, %s21
      %p27 = scmp.ge.s32.totalorder %s26, 2
      %s28 = scalar_select %p27, 0, %s26
      %s29 = sadd.s32 1, %s20
      %s30 = scalar_select %p27, %s29, %s20
      %p31 = scmp.ge.s32.totalorder %s30, 2
      %s32 = scalar_select %p31, 0, %s30
      %s33 = ssub.s32 %s20, %s32
      %s34 = ssub.s32 %s21, %s28
      %s35 = sor.u32 %s33, %s34
      %p36 = scmp.eq.s32.totalorder %s35, 0
      %s38 = sadd.s32 %s37, 1
      %s39 = scalar_select %p36, %s37, %s38
      %p42 = pneg %p36
      %p43 = scmp.eq.s32.totalorder %s13, 3
      %p44 = por %p42, %p43
      %p45 = scmp.ne.s32.totalorder %s37, %s40
      %p46 = scmp.eq.s32.totalorder %s13, 0
      %p47 = por %p45, %p46
      %p48 = scmp.ne.s32.totalorder %s37, %s40
      %p49 = scmp.eq.s32.totalorder %s18, 3
      %p50 = por %p48, %p49
      %p51 = scmp.ne.s32.totalorder %s40, %s41
      %p52 = scmp.eq.s32.totalorder %s18, 0
      %p53 = por %p51, %p52
      %p54 = scmp.ne.s32.totalorder %s40, %s41
      %p55 = scmp.eq.s32.totalorder %s19, 3
      %p56 = por %p54, %p55
      %p58 = scmp.ne.s32.totalorder %s41, %s57
      %p59 = scmp.eq.s32.totalorder %s19, 0
      %p60 = por %p58, %p59
      %s61 = ssub.s32 %s20, %s32
      %p62 = scmp.eq.s32.totalorder %s61, 0
      %s64 = sadd.s32 %s63, 1
      %s65 = scalar_select %p62, %s63, %s64
      %p68 = pneg %p62
      %p69 = scmp.eq.s32.totalorder %s13, 3
      %p70 = por %p68, %p69
      %p71 = scmp.ne.s32.totalorder %s63, %s66
      %p72 = scmp.eq.s32.totalorder %s13, 0
      %p73 = por %p71, %p72
      %p74 = scmp.ne.s32.totalorder %s63, %s66
      %p75 = scmp.eq.s32.totalorder %s18, 3
      %p76 = por %p74, %p75
      %p77 = scmp.ne.s32.totalorder %s66, %s67
      %p78 = scmp.eq.s32.totalorder %s18, 0
      %p79 = por %p77, %p78
      %p80 = scmp.ne.s32.totalorder %s66, %s67
      %p81 = scmp.eq.s32.totalorder %s19, 3
      %p82 = por %p80, %p81
      %p84 = scmp.ne.s32.totalorder %s67, %s83
      %p85 = scmp.eq.s32.totalorder %s19, 0
      %p86 = por %p84, %p85
      %p87 = scmp.le.s32.totalorder 1, %s13
      %p88 = scmp.lt.s32.totalorder %s13, 5
      %p89 = pnand %p87, %p88
      %p90 = pneg %p89
      // Predicated region
      $region9: #{tpu_custom_call.1} parent=5 // pred_check
        _
      $region10: #{tpu_custom_call.1} parent=5 // pred_check_branch
        %92 = sbr.rel (%p89) target = $region12
      $region11: #{tpu_custom_call.1} parent=5 // pred_region
        %s93 = ssub.s32 %s13, 1
      $region12: #{tpu_custom_call.1} parent=5 // pred_fallthru
        _
      %p94 = scmp.lt.s32.totalorder %s13, 4
      // Predicated region
      $region13: #{tpu_custom_call.1} parent=5 // pred_check
        %p95 = pneg %p94
      $region14: #{tpu_custom_call.1} parent=5 // pred_check_branch
        %97 = sbr.rel (%p95) target = $region16
      $region15: #{tpu_custom_call.1} parent=5 // pred_region
        // Predicated region
        $region17: #{tpu_custom_call.1} parent=15 // pred_check
          %p98 = pneg %p47
        $region18: #{tpu_custom_call.1} parent=15 // pred_check_branch
          %100 = sbr.rel (%p98) target = $region20
        $region19: #{tpu_custom_call.1} parent=15 // pred_region
          #allocation8 [shape = 'u32[6]{0}', space=smem, size = 0x18, scoped, tag = 'DMA stride descriptor']
          %s101 = sand.u32 %s37, 1
          %s102 = scalar_lea.sflag [#allocation4], %s101
          %s103 = sand.u32 %s37, 1
          %s104 = smul.addr %s103, 1024
          %s105 = scalar_lea.vmem [#allocation3], %s104
          %s106 = smul.u32 16, %s20
          %s107 = smul.u32 2, %s21
          %s108 = ssub.s32 24, %s106
          %p109 = scmp.lt.s32.totalorder %s108, 16
          %s110 = scalar_select %p109, %s108, 16
          %s111 = smul.u32 512, %s110
          %s112 = smul.u32 %s111, 2
          %s114 = ssub.s32 16384, %s112
          %115 = vsyncadd %s102, %s114
          %p116 = scmp.ne.s32.totalorder 0, %s112
          %s117 = smul.addr %s106, 4
          %s118 = sadd.s32 %s107, %s117
          %s119 = smul.addr %s118, 128
          %s120 = scalar_lea.hbm %s0, %s119
          %s121 = smul.u32 16, %s110
          %s122 = smul.u32 %s121, 4
          %s124 = sshll.u32 1, 14
          %s125 = sxor.u32 4294967295, %s124
          %s127 = sld [smem:[#allocation0]]
          %s128 = sadd.s32 2, %s127
          %s130 = sshll.u32 7, 26
          %s131 = sxor.u32 4294967295, %s130
          %s132 = sand.u32 0, %s131
          %s133 = sshll.u32 %s128, 26
          %s134 = sor.u32 %s132, %s133
          %s135 = sshll.u32 %s105, 4
          %s136 = int_to_ptr.vmem [resolvable:$true] %s135
          %s137 = sshll.u32 %s122, 4
          %142 = sst [smem:[#allocation8]] 12288
          %s143 = scalar_lea.smem [#allocation8], 1
          %144 = sst [smem:[%s143]] 4096
          %s145 = scalar_lea.smem [#allocation8], 2
          %146 = sst [smem:[%s145]] %s110
          %s147 = scalar_lea.smem [#allocation8], 3
          %148 = sst [smem:[%s147]] 512
          %s149 = scalar_lea.smem [#allocation8], 4
          %150 = sst [smem:[%s149]] 256
          %s151 = scalar_lea.smem [#allocation8], 5
          %152 = sst [smem:[%s151]] 16
          %154 = dma.general (%p116), %s120, %s137, %s136, %s102, [#allocation7], [#allocation8], %s134, 0
        $region20: #{tpu_custom_call.1} parent=15 // pred_fallthru
          _
      $region16: #{tpu_custom_call.1} parent=5 // pred_fallthru
        _
      %p155 = scmp.le.s32.totalorder 1, %s13
      %p156 = scmp.lt.s32.totalorder %s13, 5
      %p157 = pnand %p155, %p156
      %p158 = pneg %p157
      // Predicated region
      $region21: #{tpu_custom_call.1} parent=5 // pred_check
        _
      $region22: #{tpu_custom_call.1} parent=5 // pred_check_branch
        %160 = sbr.rel (%p157) target = $region24
      $region23: #{tpu_custom_call.1} parent=5 // pred_region
        %s161 = ssub.s32 %s13, 1
        %s162 = sand.u32 %s40, 1
        %s163 = scalar_lea.sflag [#allocation4], %s162
        %s164 = sand.u32 %s40, 1
        %s165 = smul.addr %s164, 1024
        %s166 = scalar_lea.vmem [#allocation3], %s165
        // Predicated region
        $region25: #{tpu_custom_call.1} parent=23 // pred_check
          %p167 = pneg %p53
        $region26: #{tpu_custom_call.1} parent=23 // pred_check_branch
          %169 = sbr.rel (%p167) target = $region28
        $region27: #{tpu_custom_call.1} parent=23 // pred_region
          %170 = dma.done %s163, 16384
        $region28: #{tpu_custom_call.1} parent=23 // pred_fallthru
          _
        %s171 = sand.u32 %s40, 1
        %s172 = scalar_lea.sflag [#allocation4], %s171
        %s173 = sand.u32 %s40, 1
        %s174 = smul.addr %s173, 1024
        %s175 = scalar_lea.vmem [#allocation3], %s174
        %p176 = pneg %p53
        %p177 = pneg %p50
        %p178 = pneg %p79
        %p179 = pneg %p76
        %s180 = sand.u32 %s66, 1
        %s181 = scalar_lea.sflag [#allocation5], %s180
        %s182 = sand.u32 %s66, 1
        %s183 = smul.addr %s182, 4
        %s184 = scalar_lea.vmem [#allocation6], %s183
        %s185 = smul.u32 16, %s22
        %s186 = smul.u32 2, %s23
        %s187 = ssub.s32 24, %s185
        %p188 = scmp.lt.s32.totalorder %s187, 16
        %s189 = scalar_select %p188, %s187, 16
        %s190 = smul.u32 512, %s189
        %s191 = smul.u32 %s190, 2
        %v192 = vld [vmem:[%s166] sm:$0xff]
        %v193 = vld [vmem:[%s166 + $0x8] sm:$0xff]
        %v194 = vld [vmem:[%s166 + $0x10] sm:$0xff]
        %v195 = vld [vmem:[%s166 + $0x18] sm:$0xff]
        %v196 = vld [vmem:[%s166 + $0x20] sm:$0xff]
        %v197 = vld [vmem:[%s166 + $0x28] sm:$0xff]
        %v198 = vld [vmem:[%s166 + $0x30] sm:$0xff]
        %v199 = vld [vmem:[%s166 + $0x38] sm:$0xff]
        %v200 = vld [vmem:[%s166 + $0x40] sm:$0xff]
        %v201 = vld [vmem:[%s166 + $0x48] sm:$0xff]
        %v202 = vld [vmem:[%s166 + $0x50] sm:$0xff]
        %v203 = vld [vmem:[%s166 + $0x58] sm:$0xff]
        %v204 = vld [vmem:[%s166 + $0x60] sm:$0xff]
        %v205 = vld [vmem:[%s166 + $0x68] sm:$0xff]
        %v206 = vld [vmem:[%s166 + $0x70] sm:$0xff]
        %v207 = vld [vmem:[%s166 + $0x78] sm:$0xff]
        %v208 = vld [vmem:[%s166 + $0x80] sm:$0xff]
        %v209 = vld [vmem:[%s166 + $0x88] sm:$0xff]
        %v210 = vld [vmem:[%s166 + $0x90] sm:$0xff]
        %v211 = vld [vmem:[%s166 + $0x98] sm:$0xff]
        %v212 = vld [vmem:[%s166 + $0xa0] sm:$0xff]
        %v213 = vld [vmem:[%s166 + $0xa8] sm:$0xff]
        %v214 = vld [vmem:[%s166 + $0xb0] sm:$0xff]
        %v215 = vld [vmem:[%s166 + $0xb8] sm:$0xff]
        %v216 = vld [vmem:[%s166 + $0xc0] sm:$0xff]
        %v217 = vld [vmem:[%s166 + $0xc8] sm:$0xff]
        %v218 = vld [vmem:[%s166 + $0xd0] sm:$0xff]
        %v219 = vld [vmem:[%s166 + $0xd8] sm:$0xff]
        %v220 = vld [vmem:[%s166 + $0xe0] sm:$0xff]
        %v221 = vld [vmem:[%s166 + $0xe8] sm:$0xff]
        %v222 = vld [vmem:[%s166 + $0xf0] sm:$0xff]
        %v223 = vld [vmem:[%s166 + $0xf8] sm:$0xff]
        %v224 = vld [vmem:[%s166 + $0x100] sm:$0xff]
        %v225 = vld [vmem:[%s166 + $0x108] sm:$0xff]
        %v226 = vld [vmem:[%s166 + $0x110] sm:$0xff]
        %v227 = vld [vmem:[%s166 + $0x118] sm:$0xff]
        %v228 = vld [vmem:[%s166 + $0x120] sm:$0xff]
        %v229 = vld [vmem:[%s166 + $0x128] sm:$0xff]
        %v230 = vld [vmem:[%s166 + $0x130] sm:$0xff]
        %v231 = vld [vmem:[%s166 + $0x138] sm:$0xff]
        %v232 = vld [vmem:[%s166 + $0x140] sm:$0xff]
        %v233 = vld [vmem:[%s166 + $0x148] sm:$0xff]
        %v234 = vld [vmem:[%s166 + $0x150] sm:$0xff]
        %v235 = vld [vmem:[%s166 + $0x158] sm:$0xff]
        %v236 = vld [vmem:[%s166 + $0x160] sm:$0xff]
        %v237 = vld [vmem:[%s166 + $0x168] sm:$0xff]
        %v238 = vld [vmem:[%s166 + $0x170] sm:$0xff]
        %v239 = vld [vmem:[%s166 + $0x178] sm:$0xff]
        %v240 = vld [vmem:[%s166 + $0x180] sm:$0xff]
        %v241 = vld [vmem:[%s166 + $0x188] sm:$0xff]
        %v242 = vld [vmem:[%s166 + $0x190] sm:$0xff]
        %v243 = vld [vmem:[%s166 + $0x198] sm:$0xff]
        %v244 = vld [vmem:[%s166 + $0x1a0] sm:$0xff]
        %v245 = vld [vmem:[%s166 + $0x1a8] sm:$0xff]
        %v246 = vld [vmem:[%s166 + $0x1b0] sm:$0xff]
        %v247 = vld [vmem:[%s166 + $0x1b8] sm:$0xff]
        %v248 = vld [vmem:[%s166 + $0x1c0] sm:$0xff]
        %v249 = vld [vmem:[%s166 + $0x1c8] sm:$0xff]
        %v250 = vld [vmem:[%s166 + $0x1d0] sm:$0xff]
        %v251 = vld [vmem:[%s166 + $0x1d8] sm:$0xff]
        %v252 = vld [vmem:[%s166 + $0x1e0] sm:$0xff]
        %v253 = vld [vmem:[%s166 + $0x1e8] sm:$0xff]
        %v254 = vld [vmem:[%s166 + $0x1f0] sm:$0xff]
        %v255 = vld [vmem:[%s166 + $0x1f8] sm:$0xff]
        %v256 = vld [vmem:[%s166 + $0x200] sm:$0xff]
        %v257 = vld [vmem:[%s166 + $0x208] sm:$0xff]
        %v258 = vld [vmem:[%s166 + $0x210] sm:$0xff]
        %v259 = vld [vmem:[%s166 + $0x218] sm:$0xff]
        %v260 = vld [vmem:[%s166 + $0x220] sm:$0xff]
        %v261 = vld [vmem:[%s166 + $0x228] sm:$0xff]
        %v262 = vld [vmem:[%s166 + $0x230] sm:$0xff]
        %v263 = vld [vmem:[%s166 + $0x238] sm:$0xff]
        %v264 = vld [vmem:[%s166 + $0x240] sm:$0xff]
        %v265 = vld [vmem:[%s166 + $0x248] sm:$0xff]
        %v266 = vld [vmem:[%s166 + $0x250] sm:$0xff]
        %v267 = vld [vmem:[%s166 + $0x258] sm:$0xff]
        %v268 = vld [vmem:[%s166 + $0x260] sm:$0xff]
        %v269 = vld [vmem:[%s166 + $0x268] sm:$0xff]
        %v270 = vld [vmem:[%s166 + $0x270] sm:$0xff]
        %v271 = vld [vmem:[%s166 + $0x278] sm:$0xff]
        %v272 = vld [vmem:[%s166 + $0x280] sm:$0xff]
        %v273 = vld [vmem:[%s166 + $0x288] sm:$0xff]
        %v274 = vld [vmem:[%s166 + $0x290] sm:$0xff]
        %v275 = vld [vmem:[%s166 + $0x298] sm:$0xff]
        %v276 = vld [vmem:[%s166 + $0x2a0] sm:$0xff]
        %v277 = vld [vmem:[%s166 + $0x2a8] sm:$0xff]
        %v278 = vld [vmem:[%s166 + $0x2b0] sm:$0xff]
        %v279 = vld [vmem:[%s166 + $0x2b8] sm:$0xff]
        %v280 = vld [vmem:[%s166 + $0x2c0] sm:$0xff]
        %v281 = vld [vmem:[%s166 + $0x2c8] sm:$0xff]
        %v282 = vld [vmem:[%s166 + $0x2d0] sm:$0xff]
        %v283 = vld [vmem:[%s166 + $0x2d8] sm:$0xff]
        %v284 = vld [vmem:[%s166 + $0x2e0] sm:$0xff]
        %v285 = vld [vmem:[%s166 + $0x2e8] sm:$0xff]
        %v286 = vld [vmem:[%s166 + $0x2f0] sm:$0xff]
        %v287 = vld [vmem:[%s166 + $0x2f8] sm:$0xff]
        %v288 = vld [vmem:[%s166 + $0x300] sm:$0xff]
        %v289 = vld [vmem:[%s166 + $0x308] sm:$0xff]
        %v290 = vld [vmem:[%s166 + $0x310] sm:$0xff]
        %v291 = vld [vmem:[%s166 + $0x318] sm:$0xff]
        %v292 = vld [vmem:[%s166 + $0x320] sm:$0xff]
        %v293 = vld [vmem:[%s166 + $0x328] sm:$0xff]
        %v294 = vld [vmem:[%s166 + $0x330] sm:$0xff]
        %v295 = vld [vmem:[%s166 + $0x338] sm:$0xff]
        %v296 = vld [vmem:[%s166 + $0x340] sm:$0xff]
        %v297 = vld [vmem:[%s166 + $0x348] sm:$0xff]
        %v298 = vld [vmem:[%s166 + $0x350] sm:$0xff]
        %v299 = vld [vmem:[%s166 + $0x358] sm:$0xff]
        %v300 = vld [vmem:[%s166 + $0x360] sm:$0xff]
        %v301 = vld [vmem:[%s166 + $0x368] sm:$0xff]
        %v302 = vld [vmem:[%s166 + $0x370] sm:$0xff]
        %v303 = vld [vmem:[%s166 + $0x378] sm:$0xff]
        %v304 = vld [vmem:[%s166 + $0x380] sm:$0xff]
        %v305 = vld [vmem:[%s166 + $0x388] sm:$0xff]
        %v306 = vld [vmem:[%s166 + $0x390] sm:$0xff]
        %v307 = vld [vmem:[%s166 + $0x398] sm:$0xff]
        %v308 = vld [vmem:[%s166 + $0x3a0] sm:$0xff]
        %v309 = vld [vmem:[%s166 + $0x3a8] sm:$0xff]
        %v310 = vld [vmem:[%s166 + $0x3b0] sm:$0xff]
        %v311 = vld [vmem:[%s166 + $0x3b8] sm:$0xff]
        %v312 = vld [vmem:[%s166 + $0x3c0] sm:$0xff]
        %v313 = vld [vmem:[%s166 + $0x3c8] sm:$0xff]
        %v314 = vld [vmem:[%s166 + $0x3d0] sm:$0xff]
        %v315 = vld [vmem:[%s166 + $0x3d8] sm:$0xff]
        %v316 = vld [vmem:[%s166 + $0x3e0] sm:$0xff]
        %v317 = vld [vmem:[%s166 + $0x3e8] sm:$0xff]
        %v318 = vld [vmem:[%s166 + $0x3f0] sm:$0xff]
        %v319 = vld [vmem:[%s166 + $0x3f8] sm:$0xff]
        %s320 = smul.u32 %s23, 256
        %s321 = ssub.s32 400, %s320
        %v322 = vlaneseq
        %v323 = vand.u32 %v322, 127
        %v324 = vadd.s32 %v323, 128
        %v325 = vstv %s321
        %vm326 = vcmp.lt.s32.totalorder %v323, %v325
        %vm327 = vcmp.lt.s32.totalorder %v324, %v325
        %v328 = vsel %vm326, 1, 0
        %v329 = vsel %vm327, 1, 0
        %vm330 = vcmp.eq.s32.totalorder %v328, 1
        %vm331 = vcmp.eq.s32.totalorder %v329, 1
        %v332 = vsel %vm330, %v192, 0.0
        %v333 = vsel %vm331, %v193, 0.0
        %v334 = vsel %vm330, %v194, 0.0
        %v335 = vsel %vm331, %v195, 0.0
        %v336 = vsel %vm330, %v196, 0.0
        %v337 = vsel %vm331, %v197, 0.0
        %v338 = vsel %vm330, %v198, 0.0
        %v339 = vsel %vm331, %v199, 0.0
        %v340 = vsel %vm330, %v200, 0.0
        %v341 = vsel %vm331, %v201, 0.0
        %v342 = vsel %vm330, %v202, 0.0
        %v343 = vsel %vm331, %v203, 0.0
        %v344 = vsel %vm330, %v204, 0.0
        %v345 = vsel %vm331, %v205, 0.0
        %v346 = vsel %vm330, %v206, 0.0
        %v347 = vsel %vm331, %v207, 0.0
        %v348 = vsel %vm330, %v208, 0.0
        %v349 = vsel %vm331, %v209, 0.0
        %v350 = vsel %vm330, %v210, 0.0
        %v351 = vsel %vm331, %v211, 0.0
        %v352 = vsel %vm330, %v212, 0.0
        %v353 = vsel %vm331, %v213, 0.0
        %v354 = vsel %vm330, %v214, 0.0
        %v355 = vsel %vm331, %v215, 0.0
        %v356 = vsel %vm330, %v216, 0.0
        %v357 = vsel %vm331, %v217, 0.0
        %v358 = vsel %vm330, %v218, 0.0
        %v359 = vsel %vm331, %v219, 0.0
        %v360 = vsel %vm330, %v220, 0.0
        %v361 = vsel %vm331, %v221, 0.0
        %v362 = vsel %vm330, %v222, 0.0
        %v363 = vsel %vm331, %v223, 0.0
        %v364 = vsel %vm330, %v224, 0.0
        %v365 = vsel %vm331, %v225, 0.0
        %v366 = vsel %vm330, %v226, 0.0
        %v367 = vsel %vm331, %v227, 0.0
        %v368 = vsel %vm330, %v228, 0.0
        %v369 = vsel %vm331, %v229, 0.0
        %v370 = vsel %vm330, %v230, 0.0
        %v371 = vsel %vm331, %v231, 0.0
        %v372 = vsel %vm330, %v232, 0.0
        %v373 = vsel %vm331, %v233, 0.0
        %v374 = vsel %vm330, %v234, 0.0
        %v375 = vsel %vm331, %v235, 0.0
        %v376 = vsel %vm330, %v236, 0.0
        %v377 = vsel %vm331, %v237, 0.0
        %v378 = vsel %vm330, %v238, 0.0
        %v379 = vsel %vm331, %v239, 0.0
        %v380 = vsel %vm330, %v240, 0.0
        %v381 = vsel %vm331, %v241, 0.0
        %v382 = vsel %vm330, %v242, 0.0
        %v383 = vsel %vm331, %v243, 0.0
        %v384 = vsel %vm330, %v244, 0.0
        %v385 = vsel %vm331, %v245, 0.0
        %v386 = vsel %vm330, %v246, 0.0
        %v387 = vsel %vm331, %v247, 0.0
        %v388 = vsel %vm330, %v248, 0.0
        %v389 = vsel %vm331, %v249, 0.0
        %v390 = vsel %vm330, %v250, 0.0
        %v391 = vsel %vm331, %v251, 0.0
        %v392 = vsel %vm330, %v252, 0.0
        %v393 = vsel %vm331, %v253, 0.0
        %v394 = vsel %vm330, %v254, 0.0
        %v395 = vsel %vm331, %v255, 0.0
        %v396 = vsel %vm330, %v256, 0.0
        %v397 = vsel %vm331, %v257, 0.0
        %v398 = vsel %vm330, %v258, 0.0
        %v399 = vsel %vm331, %v259, 0.0
        %v400 = vsel %vm330, %v260, 0.0
        %v401 = vsel %vm331, %v261, 0.0
        %v402 = vsel %vm330, %v262, 0.0
        %v403 = vsel %vm331, %v263, 0.0
        %v404 = vsel %vm330, %v264, 0.0
        %v405 = vsel %vm331, %v265, 0.0
        %v406 = vsel %vm330, %v266, 0.0
        %v407 = vsel %vm331, %v267, 0.0
        %v408 = vsel %vm330, %v268, 0.0
        %v409 = vsel %vm331, %v269, 0.0
        %v410 = vsel %vm330, %v270, 0.0
        %v411 = vsel %vm331, %v271, 0.0
        %v412 = vsel %vm330, %v272, 0.0
        %v413 = vsel %vm331, %v273, 0.0
        %v414 = vsel %vm330, %v274, 0.0
        %v415 = vsel %vm331, %v275, 0.0
        %v416 = vsel %vm330, %v276, 0.0
        %v417 = vsel %vm331, %v277, 0.0
        %v418 = vsel %vm330, %v278, 0.0
        %v419 = vsel %vm331, %v279, 0.0
        %v420 = vsel %vm330, %v280, 0.0
        %v421 = vsel %vm331, %v281, 0.0
        %v422 = vsel %vm330, %v282, 0.0
        %v423 = vsel %vm331, %v283, 0.0
        %v424 = vsel %vm330, %v284, 0.0
        %v425 = vsel %vm331, %v285, 0.0
        %v426 = vsel %vm330, %v286, 0.0
        %v427 = vsel %vm331, %v287, 0.0
        %v428 = vsel %vm330, %v288, 0.0
        %v429 = vsel %vm331, %v289, 0.0
        %v430 = vsel %vm330, %v290, 0.0
        %v431 = vsel %vm331, %v291, 0.0
        %v432 = vsel %vm330, %v292, 0.0
        %v433 = vsel %vm331, %v293, 0.0
        %v434 = vsel %vm330, %v294, 0.0
        %v435 = vsel %vm331, %v295, 0.0
        %v436 = vsel %vm330, %v296, 0.0
        %v437 = vsel %vm331, %v297, 0.0
        %v438 = vsel %vm330, %v298, 0.0
        %v439 = vsel %vm331, %v299, 0.0
        %v440 = vsel %vm330, %v300, 0.0
        %v441 = vsel %vm331, %v301, 0.0
        %v442 = vsel %vm330, %v302, 0.0
        %v443 = vsel %vm331, %v303, 0.0
        %v444 = vsel %vm330, %v304, 0.0
        %v445 = vsel %vm331, %v305, 0.0
        %v446 = vsel %vm330, %v306, 0.0
        %v447 = vsel %vm331, %v307, 0.0
        %v448 = vsel %vm330, %v308, 0.0
        %v449 = vsel %vm331, %v309, 0.0
        %v450 = vsel %vm330, %v310, 0.0
        %v451 = vsel %vm331, %v311, 0.0
        %v452 = vsel %vm330, %v312, 0.0
        %v453 = vsel %vm331, %v313, 0.0
        %v454 = vsel %vm330, %v314, 0.0
        %v455 = vsel %vm331, %v315, 0.0
        %v456 = vsel %vm330, %v316, 0.0
        %v457 = vsel %vm331, %v317, 0.0
        %v458 = vsel %vm330, %v318, 0.0
        %v459 = vsel %vm331, %v319, 0.0
        %s460 = smul.u32 %s22, 128
        %s461 = ssub.s32 192, %s460
        %v462 = vlaneseq
        %v463 = vshrl.u32 %v462, 7
        %v464 = vadd.s32 %v463, 8
        %v465 = vadd.s32 %v463, 16
        %v466 = vadd.s32 %v463, 24
        %v467 = vadd.s32 %v463, 32
        %v468 = vadd.s32 %v463, 40
        %v469 = vadd.s32 %v463, 48
        %v470 = vadd.s32 %v463, 56
        %v471 = vadd.s32 %v463, 64
        %v472 = vadd.s32 %v463, 72
        %v473 = vadd.s32 %v463, 80
        %v474 = vadd.s32 %v463, 88
        %v475 = vadd.s32 %v463, 96
        %v476 = vadd.s32 %v463, 104
        %v477 = vadd.s32 %v463, 112
        %v478 = vadd.s32 %v463, 120
        %v479 = vstv %s461
        %vm480 = vcmp.lt.s32.totalorder %v463, %v479
        %vm481 = vcmp.lt.s32.totalorder %v464, %v479
        %vm482 = vcmp.lt.s32.totalorder %v465, %v479
        %vm483 = vcmp.lt.s32.totalorder %v466, %v479
        %vm484 = vcmp.lt.s32.totalorder %v467, %v479
        %vm485 = vcmp.lt.s32.totalorder %v468, %v479
        %vm486 = vcmp.lt.s32.totalorder %v469, %v479
        %vm487 = vcmp.lt.s32.totalorder %v470, %v479
        %vm488 = vcmp.lt.s32.totalorder %v471, %v479
        %vm489 = vcmp.lt.s32.totalorder %v472, %v479
        %vm490 = vcmp.lt.s32.totalorder %v473, %v479
        %vm491 = vcmp.lt.s32.totalorder %v474, %v479
        %vm492 = vcmp.lt.s32.totalorder %v475, %v479
        %vm493 = vcmp.lt.s32.totalorder %v476, %v479
        %vm494 = vcmp.lt.s32.totalorder %v477, %v479
        %vm495 = vcmp.lt.s32.totalorder %v478, %v479
        %v496 = vsel %vm480, 1, 0
        %v497 = vsel %vm481, 1, 0
        %v498 = vsel %vm482, 1, 0
        %v499 = vsel %vm483, 1, 0
        %v500 = vsel %vm484, 1, 0
        %v501 = vsel %vm485, 1, 0
        %v502 = vsel %vm486, 1, 0
        %v503 = vsel %vm487, 1, 0
        %v504 = vsel %vm488, 1, 0
        %v505 = vsel %vm489, 1, 0
        %v506 = vsel %vm490, 1, 0
        %v507 = vsel %vm491, 1, 0
        %v508 = vsel %vm492, 1, 0
        %v509 = vsel %vm493, 1, 0
        %v510 = vsel %vm494, 1, 0
        %v511 = vsel %vm495, 1, 0
        %vm512 = vcmp.eq.s32.totalorder %v496, 1
        %vm513 = vcmp.eq.s32.totalorder %v497, 1
        %vm514 = vcmp.eq.s32.totalorder %v498, 1
        %vm515 = vcmp.eq.s32.totalorder %v499, 1
        %vm516 = vcmp.eq.s32.totalorder %v500, 1
        %vm517 = vcmp.eq.s32.totalorder %v501, 1
        %vm518 = vcmp.eq.s32.totalorder %v502, 1
        %vm519 = vcmp.eq.s32.totalorder %v503, 1
        %vm520 = vcmp.eq.s32.totalorder %v504, 1
        %vm521 = vcmp.eq.s32.totalorder %v505, 1
        %vm522 = vcmp.eq.s32.totalorder %v506, 1
        %vm523 = vcmp.eq.s32.totalorder %v507, 1
        %vm524 = vcmp.eq.s32.totalorder %v508, 1
        %vm525 = vcmp.eq.s32.totalorder %v509, 1
        %vm526 = vcmp.eq.s32.totalorder %v510, 1
        %vm527 = vcmp.eq.s32.totalorder %v511, 1
        %v528 = vsel %vm512, %v332, 0.0
        %v529 = vsel %vm512, %v333, 0.0
        %v530 = vsel %vm513, %v334, 0.0
        %v531 = vsel %vm513, %v335, 0.0
        %v532 = vsel %vm514, %v336, 0.0
        %v533 = vsel %vm514, %v337, 0.0
        %v534 = vsel %vm515, %v338, 0.0
        %v535 = vsel %vm515, %v339, 0.0
        %v536 = vsel %vm516, %v340, 0.0
        %v537 = vsel %vm516, %v341, 0.0
        %v538 = vsel %vm517, %v342, 0.0
        %v539 = vsel %vm517, %v343, 0.0
        %v540 = vsel %vm518, %v344, 0.0
        %v541 = vsel %vm518, %v345, 0.0
        %v542 = vsel %vm519, %v346, 0.0
        %v543 = vsel %vm519, %v347, 0.0
        %v544 = vsel %vm520, %v348, 0.0
        %v545 = vsel %vm520, %v349, 0.0
        %v546 = vsel %vm521, %v350, 0.0
        %v547 = vsel %vm521, %v351, 0.0
        %v548 = vsel %vm522, %v352, 0.0
        %v549 = vsel %vm522, %v353, 0.0
        %v550 = vsel %vm523, %v354, 0.0
        %v551 = vsel %vm523, %v355, 0.0
        %v552 = vsel %vm524, %v356, 0.0
        %v553 = vsel %vm524, %v357, 0.0
        %v554 = vsel %vm525, %v358, 0.0
        %v555 = vsel %vm525, %v359, 0.0
        %v556 = vsel %vm526, %v360, 0.0
        %v557 = vsel %vm526, %v361, 0.0
        %v558 = vsel %vm527, %v362, 0.0
        %v559 = vsel %vm527, %v363, 0.0
        %v560 = vsel %vm512, %v364, 0.0
        %v561 = vsel %vm512, %v365, 0.0
        %v562 = vsel %vm513, %v366, 0.0
        %v563 = vsel %vm513, %v367, 0.0
        %v564 = vsel %vm514, %v368, 0.0
        %v565 = vsel %vm514, %v369, 0.0
        %v566 = vsel %vm515, %v370, 0.0
        %v567 = vsel %vm515, %v371, 0.0
        %v568 = vsel %vm516, %v372, 0.0
        %v569 = vsel %vm516, %v373, 0.0
        %v570 = vsel %vm517, %v374, 0.0
        %v571 = vsel %vm517, %v375, 0.0
        %v572 = vsel %vm518, %v376, 0.0
        %v573 = vsel %vm518, %v377, 0.0
        %v574 = vsel %vm519, %v378, 0.0
        %v575 = vsel %vm519, %v379, 0.0
        %v576 = vsel %vm520, %v380, 0.0
        %v577 = vsel %vm520, %v381, 0.0
        %v578 = vsel %vm521, %v382, 0.0
        %v579 = vsel %vm521, %v383, 0.0
        %v580 = vsel %vm522, %v384, 0.0
        %v581 = vsel %vm522, %v385, 0.0
        %v582 = vsel %vm523, %v386, 0.0
        %v583 = vsel %vm523, %v387, 0.0
        %v584 = vsel %vm524, %v388, 0.0
        %v585 = vsel %vm524, %v389, 0.0
        %v586 = vsel %vm525, %v390, 0.0
        %v587 = vsel %vm525, %v391, 0.0
        %v588 = vsel %vm526, %v392, 0.0
        %v589 = vsel %vm526, %v393, 0.0
        %v590 = vsel %vm527, %v394, 0.0
        %v591 = vsel %vm527, %v395, 0.0
        %v592 = vsel %vm512, %v396, 0.0
        %v593 = vsel %vm512, %v397, 0.0
        %v594 = vsel %vm513, %v398, 0.0
        %v595 = vsel %vm513, %v399, 0.0
        %v596 = vsel %vm514, %v400, 0.0
        %v597 = vsel %vm514, %v401, 0.0
        %v598 = vsel %vm515, %v402, 0.0
        %v599 = vsel %vm515, %v403, 0.0
        %v600 = vsel %vm516, %v404, 0.0
        %v601 = vsel %vm516, %v405, 0.0
        %v602 = vsel %vm517, %v406, 0.0
        %v603 = vsel %vm517, %v407, 0.0
        %v604 = vsel %vm518, %v408, 0.0
        %v605 = vsel %vm518, %v409, 0.0
        %v606 = vsel %vm519, %v410, 0.0
        %v607 = vsel %vm519, %v411, 0.0
        %v608 = vsel %vm520, %v412, 0.0
        %v609 = vsel %vm520, %v413, 0.0
        %v610 = vsel %vm521, %v414, 0.0
        %v611 = vsel %vm521, %v415, 0.0
        %v612 = vsel %vm522, %v416, 0.0
        %v613 = vsel %vm522, %v417, 0.0
        %v614 = vsel %vm523, %v418, 0.0
        %v615 = vsel %vm523, %v419, 0.0
        %v616 = vsel %vm524, %v420, 0.0
        %v617 = vsel %vm524, %v421, 0.0
        %v618 = vsel %vm525, %v422, 0.0
        %v619 = vsel %vm525, %v423, 0.0
        %v620 = vsel %vm526, %v424, 0.0
        %v621 = vsel %vm526, %v425, 0.0
        %v622 = vsel %vm527, %v426, 0.0
        %v623 = vsel %vm527, %v427, 0.0
        %v624 = vsel %vm512, %v428, 0.0
        %v625 = vsel %vm512, %v429, 0.0
        %v626 = vsel %vm513, %v430, 0.0
        %v627 = vsel %vm513, %v431, 0.0
        %v628 = vsel %vm514, %v432, 0.0
        %v629 = vsel %vm514, %v433, 0.0
        %v630 = vsel %vm515, %v434, 0.0
        %v631 = vsel %vm515, %v435, 0.0
        %v632 = vsel %vm516, %v436, 0.0
        %v633 = vsel %vm516, %v437, 0.0
        %v634 = vsel %vm517, %v438, 0.0
        %v635 = vsel %vm517, %v439, 0.0
        %v636 = vsel %vm518, %v440, 0.0
        %v637 = vsel %vm518, %v441, 0.0
        %v638 = vsel %vm519, %v442, 0.0
        %v639 = vsel %vm519, %v443, 0.0
        %v640 = vsel %vm520, %v444, 0.0
        %v641 = vsel %vm520, %v445, 0.0
        %v642 = vsel %vm521, %v446, 0.0
        %v643 = vsel %vm521, %v447, 0.0
        %v644 = vsel %vm522, %v448, 0.0
        %v645 = vsel %vm522, %v449, 0.0
        %v646 = vsel %vm523, %v450, 0.0
        %v647 = vsel %vm523, %v451, 0.0
        %v648 = vsel %vm524, %v452, 0.0
        %v649 = vsel %vm524, %v453, 0.0
        %v650 = vsel %vm525, %v454, 0.0
        %v651 = vsel %vm525, %v455, 0.0
        %v652 = vsel %vm526, %v456, 0.0
        %v653 = vsel %vm526, %v457, 0.0
        %v654 = vsel %vm527, %v458, 0.0
        %v655 = vsel %vm527, %v459, 0.0
        %p656 = scmp.eq.s32.totalorder %s23, 0
        // Predicated region
        $region29: #{tpu_custom_call.1} parent=23 // pred_check
          %p657 = pneg %p656
        $region30: #{tpu_custom_call.1} parent=23 // pred_check_branch
          %659 = sbr.rel (%p657) target = $region32
        $region31: #{tpu_custom_call.1} parent=23 // pred_region
          %660 = vst [vmem:[#allocation2] sm:$0xff] 0.0
          %661 = vst [vmem:[#allocation2 + $0x8] sm:$0xff] 0.0
          %662 = vst [vmem:[#allocation2 + $0x10] sm:$0xff] 0.0
          %663 = vst [vmem:[#allocation2 + $0x18] sm:$0xff] 0.0
          %664 = vst [vmem:[#allocation2 + $0x20] sm:$0xff] 0.0
          %665 = vst [vmem:[#allocation2 + $0x28] sm:$0xff] 0.0
          %666 = vst [vmem:[#allocation2 + $0x30] sm:$0xff] 0.0
          %667 = vst [vmem:[#allocation2 + $0x38] sm:$0xff] 0.0
          %668 = vst [vmem:[#allocation2 + $0x40] sm:$0xff] 0.0
          %669 = vst [vmem:[#allocation2 + $0x48] sm:$0xff] 0.0
          %670 = vst [vmem:[#allocation2 + $0x50] sm:$0xff] 0.0
          %671 = vst [vmem:[#allocation2 + $0x58] sm:$0xff] 0.0
          %672 = vst [vmem:[#allocation2 + $0x60] sm:$0xff] 0.0
          %673 = vst [vmem:[#allocation2 + $0x68] sm:$0xff] 0.0
          %674 = vst [vmem:[#allocation2 + $0x70] sm:$0xff] 0.0
          %675 = vst [vmem:[#allocation2 + $0x78] sm:$0xff] 0.0
          %676 = vst [vmem:[#allocation2 + $0x80] sm:$0xff] 0.0
          %677 = vst [vmem:[#allocation2 + $0x88] sm:$0xff] 0.0
          %678 = vst [vmem:[#allocation2 + $0x90] sm:$0xff] 0.0
          %679 = vst [vmem:[#allocation2 + $0x98] sm:$0xff] 0.0
          %680 = vst [vmem:[#allocation2 + $0xa0] sm:$0xff] 0.0
          %681 = vst [vmem:[#allocation2 + $0xa8] sm:$0xff] 0.0
          %682 = vst [vmem:[#allocation2 + $0xb0] sm:$0xff] 0.0
          %683 = vst [vmem:[#allocation2 + $0xb8] sm:$0xff] 0.0
          %684 = vst [vmem:[#allocation2 + $0xc0] sm:$0xff] 0.0
          %685 = vst [vmem:[#allocation2 + $0xc8] sm:$0xff] 0.0
          %686 = vst [vmem:[#allocation2 + $0xd0] sm:$0xff] 0.0
          %687 = vst [vmem:[#allocation2 + $0xd8] sm:$0xff] 0.0
          %688 = vst [vmem:[#allocation2 + $0xe0] sm:$0xff] 0.0
          %689 = vst [vmem:[#allocation2 + $0xe8] sm:$0xff] 0.0
          %690 = vst [vmem:[#allocation2 + $0xf0] sm:$0xff] 0.0
          %691 = vst [vmem:[#allocation2 + $0xf8] sm:$0xff] 0.0
          %692 = vst [vmem:[#allocation2 + $0x100] sm:$0xff] 0.0
          %693 = vst [vmem:[#allocation2 + $0x108] sm:$0xff] 0.0
          %694 = vst [vmem:[#allocation2 + $0x110] sm:$0xff] 0.0
          %695 = vst [vmem:[#allocation2 + $0x118] sm:$0xff] 0.0
          %696 = vst [vmem:[#allocation2 + $0x120] sm:$0xff] 0.0
          %697 = vst [vmem:[#allocation2 + $0x128] sm:$0xff] 0.0
          %698 = vst [vmem:[#allocation2 + $0x130] sm:$0xff] 0.0
          %699 = vst [vmem:[#allocation2 + $0x138] sm:$0xff] 0.0
          %700 = vst [vmem:[#allocation2 + $0x140] sm:$0xff] 0.0
          %701 = vst [vmem:[#allocation2 + $0x148] sm:$0xff] 0.0
          %702 = vst [vmem:[#allocation2 + $0x150] sm:$0xff] 0.0
          %703 = vst [vmem:[#allocation2 + $0x158] sm:$0xff] 0.0
          %704 = vst [vmem:[#allocation2 + $0x160] sm:$0xff] 0.0
          %705 = vst [vmem:[#allocation2 + $0x168] sm:$0xff] 0.0
          %706 = vst [vmem:[#allocation2 + $0x170] sm:$0xff] 0.0
          %707 = vst [vmem:[#allocation2 + $0x178] sm:$0xff] 0.0
          %708 = vst [vmem:[#allocation2 + $0x180] sm:$0xff] 0.0
          %709 = vst [vmem:[#allocation2 + $0x188] sm:$0xff] 0.0
          %710 = vst [vmem:[#allocation2 + $0x190] sm:$0xff] 0.0
          %711 = vst [vmem:[#allocation2 + $0x198] sm:$0xff] 0.0
          %712 = vst [vmem:[#allocation2 + $0x1a0] sm:$0xff] 0.0
          %713 = vst [vmem:[#allocation2 + $0x1a8] sm:$0xff] 0.0
          %714 = vst [vmem:[#allocation2 + $0x1b0] sm:$0xff] 0.0
          %715 = vst [vmem:[#allocation2 + $0x1b8] sm:$0xff] 0.0
          %716 = vst [vmem:[#allocation2 + $0x1c0] sm:$0xff] 0.0
          %717 = vst [vmem:[#allocation2 + $0x1c8] sm:$0xff] 0.0
          %718 = vst [vmem:[#allocation2 + $0x1d0] sm:$0xff] 0.0
          %719 = vst [vmem:[#allocation2 + $0x1d8] sm:$0xff] 0.0
          %720 = vst [vmem:[#allocation2 + $0x1e0] sm:$0xff] 0.0
          %721 = vst [vmem:[#allocation2 + $0x1e8] sm:$0xff] 0.0
          %722 = vst [vmem:[#allocation2 + $0x1f0] sm:$0xff] 0.0
          %723 = vst [vmem:[#allocation2 + $0x1f8] sm:$0xff] 0.0
        $region32: #{tpu_custom_call.1} parent=23 // pred_fallthru
          _
        %v724 = vadd.f32 %v528, %v529
        %v725 = vadd.f32 %v530, %v531
        %v726 = vadd.f32 %v532, %v533
        %v727 = vadd.f32 %v534, %v535
        %v728 = vadd.f32 %v536, %v537
        %v729 = vadd.f32 %v538, %v539
        %v730 = vadd.f32 %v540, %v541
        %v731 = vadd.f32 %v542, %v543
        %v732 = vadd.f32 %v544, %v545
        %v733 = vadd.f32 %v546, %v547
        %v734 = vadd.f32 %v548, %v549
        %v735 = vadd.f32 %v550, %v551
        %v736 = vadd.f32 %v552, %v553
        %v737 = vadd.f32 %v554, %v555
        %v738 = vadd.f32 %v556, %v557
        %v739 = vadd.f32 %v558, %v559
        %v740 = vadd.f32 %v560, %v561
        %v741 = vadd.f32 %v562, %v563
        %v742 = vadd.f32 %v564, %v565
        %v743 = vadd.f32 %v566, %v567
        %v744 = vadd.f32 %v568, %v569
        %v745 = vadd.f32 %v570, %v571
        %v746 = vadd.f32 %v572, %v573
        %v747 = vadd.f32 %v574, %v575
        %v748 = vadd.f32 %v576, %v577
        %v749 = vadd.f32 %v578, %v579
        %v750 = vadd.f32 %v580, %v581
        %v751 = vadd.f32 %v582, %v583
        %v752 = vadd.f32 %v584, %v585
        %v753 = vadd.f32 %v586, %v587
        %v754 = vadd.f32 %v588, %v589
        %v755 = vadd.f32 %v590, %v591
        %v756 = vadd.f32 %v592, %v593
        %v757 = vadd.f32 %v594, %v595
        %v758 = vadd.f32 %v596, %v597
        %v759 = vadd.f32 %v598, %v599
        %v760 = vadd.f32 %v600, %v601
        %v761 = vadd.f32 %v602, %v603
        %v762 = vadd.f32 %v604, %v605
        %v763 = vadd.f32 %v606, %v607
        %v764 = vadd.f32 %v608, %v609
        %v765 = vadd.f32 %v610, %v611
        %v766 = vadd.f32 %v612, %v613
        %v767 = vadd.f32 %v614, %v615
        %v768 = vadd.f32 %v616, %v617
        %v769 = vadd.f32 %v618, %v619
        %v770 = vadd.f32 %v620, %v621
        %v771 = vadd.f32 %v622, %v623
        %v772 = vadd.f32 %v624, %v625
        %v773 = vadd.f32 %v626, %v627
        %v774 = vadd.f32 %v628, %v629
        %v775 = vadd.f32 %v630, %v631
        %v776 = vadd.f32 %v632, %v633
        %v777 = vadd.f32 %v634, %v635
        %v778 = vadd.f32 %v636, %v637
        %v779 = vadd.f32 %v638, %v639
        %v780 = vadd.f32 %v640, %v641
        %v781 = vadd.f32 %v642, %v643
        %v782 = vadd.f32 %v644, %v645
        %v783 = vadd.f32 %v646, %v647
        %v784 = vadd.f32 %v648, %v649
        %v785 = vadd.f32 %v650, %v651
        %v786 = vadd.f32 %v652, %v653
        %v787 = vadd.f32 %v654, %v655
        %v788 = vld [vmem:[#allocation2] sm:$0xff]
        %v789 = vld [vmem:[#allocation2 + $0x8] sm:$0xff]
        %v790 = vld [vmem:[#allocation2 + $0x10] sm:$0xff]
        %v791 = vld [vmem:[#allocation2 + $0x18] sm:$0xff]
        %v792 = vld [vmem:[#allocation2 + $0x20] sm:$0xff]
        %v793 = vld [vmem:[#allocation2 + $0x28] sm:$0xff]
        %v794 = vld [vmem:[#allocation2 + $0x30] sm:$0xff]
        %v795 = vld [vmem:[#allocation2 + $0x38] sm:$0xff]
        %v796 = vld [vmem:[#allocation2 + $0x40] sm:$0xff]
        %v797 = vld [vmem:[#allocation2 + $0x48] sm:$0xff]
        %v798 = vld [vmem:[#allocation2 + $0x50] sm:$0xff]
        %v799 = vld [vmem:[#allocation2 + $0x58] sm:$0xff]
        %v800 = vld [vmem:[#allocation2 + $0x60] sm:$0xff]
        %v801 = vld [vmem:[#allocation2 + $0x68] sm:$0xff]
        %v802 = vld [vmem:[#allocation2 + $0x70] sm:$0xff]
        %v803 = vld [vmem:[#allocation2 + $0x78] sm:$0xff]
        %v804 = vld [vmem:[#allocation2 + $0x80] sm:$0xff]
        %v805 = vld [vmem:[#allocation2 + $0x88] sm:$0xff]
        %v806 = vld [vmem:[#allocation2 + $0x90] sm:$0xff]
        %v807 = vld [vmem:[#allocation2 + $0x98] sm:$0xff]
        %v808 = vld [vmem:[#allocation2 + $0xa0] sm:$0xff]
        %v809 = vld [vmem:[#allocation2 + $0xa8] sm:$0xff]
        %v810 = vld [vmem:[#allocation2 + $0xb0] sm:$0xff]
        %v811 = vld [vmem:[#allocation2 + $0xb8] sm:$0xff]
        %v812 = vld [vmem:[#allocation2 + $0xc0] sm:$0xff]
        %v813 = vld [vmem:[#allocation2 + $0xc8] sm:$0xff]
        %v814 = vld [vmem:[#allocation2 + $0xd0] sm:$0xff]
        %v815 = vld [vmem:[#allocation2 + $0xd8] sm:$0xff]
        %v816 = vld [vmem:[#allocation2 + $0xe0] sm:$0xff]
        %v817 = vld [vmem:[#allocation2 + $0xe8] sm:$0xff]
        %v818 = vld [vmem:[#allocation2 + $0xf0] sm:$0xff]
        %v819 = vld [vmem:[#allocation2 + $0xf8] sm:$0xff]
        %v820 = vld [vmem:[#allocation2 + $0x100] sm:$0xff]
        %v821 = vld [vmem:[#allocation2 + $0x108] sm:$0xff]
        %v822 = vld [vmem:[#allocation2 + $0x110] sm:$0xff]
        %v823 = vld [vmem:[#allocation2 + $0x118] sm:$0xff]
        %v824 = vld [vmem:[#allocation2 + $0x120] sm:$0xff]
        %v825 = vld [vmem:[#allocation2 + $0x128] sm:$0xff]
        %v826 = vld [vmem:[#allocation2 + $0x130] sm:$0xff]
        %v827 = vld [vmem:[#allocation2 + $0x138] sm:$0xff]
        %v828 = vld [vmem:[#allocation2 + $0x140] sm:$0xff]
        %v829 = vld [vmem:[#allocation2 + $0x148] sm:$0xff]
        %v830 = vld [vmem:[#allocation2 + $0x150] sm:$0xff]
        %v831 = vld [vmem:[#allocation2 + $0x158] sm:$0xff]
        %v832 = vld [vmem:[#allocation2 + $0x160] sm:$0xff]
        %v833 = vld [vmem:[#allocation2 + $0x168] sm:$0xff]
        %v834 = vld [vmem:[#allocation2 + $0x170] sm:$0xff]
        %v835 = vld [vmem:[#allocation2 + $0x178] sm:$0xff]
        %v836 = vld [vmem:[#allocation2 + $0x180] sm:$0xff]
        %v837 = vld [vmem:[#allocation2 + $0x188] sm:$0xff]
        %v838 = vld [vmem:[#allocation2 + $0x190] sm:$0xff]
        %v839 = vld [vmem:[#allocation2 + $0x198] sm:$0xff]
        %v840 = vld [vmem:[#allocation2 + $0x1a0] sm:$0xff]
        %v841 = vld [vmem:[#allocation2 + $0x1a8] sm:$0xff]
        %v842 = vld [vmem:[#allocation2 + $0x1b0] sm:$0xff]
        %v843 = vld [vmem:[#allocation2 + $0x1b8] sm:$0xff]
        %v844 = vld [vmem:[#allocation2 + $0x1c0] sm:$0xff]
        %v845 = vld [vmem:[#allocation2 + $0x1c8] sm:$0xff]
        %v846 = vld [vmem:[#allocation2 + $0x1d0] sm:$0xff]
        %v847 = vld [vmem:[#allocation2 + $0x1d8] sm:$0xff]
        %v848 = vld [vmem:[#allocation2 + $0x1e0] sm:$0xff]
        %v849 = vld [vmem:[#allocation2 + $0x1e8] sm:$0xff]
        %v850 = vld [vmem:[#allocation2 + $0x1f0] sm:$0xff]
        %v851 = vld [vmem:[#allocation2 + $0x1f8] sm:$0xff]
        %v852 = vadd.f32 %v788, %v724
        %v853 = vadd.f32 %v789, %v725
        %v854 = vadd.f32 %v790, %v726
        %v855 = vadd.f32 %v791, %v727
        %v856 = vadd.f32 %v792, %v728
        %v857 = vadd.f32 %v793, %v729
        %v858 = vadd.f32 %v794, %v730
        %v859 = vadd.f32 %v795, %v731
        %v860 = vadd.f32 %v796, %v732
        %v861 = vadd.f32 %v797, %v733
        %v862 = vadd.f32 %v798, %v734
        %v863 = vadd.f32 %v799, %v735
        %v864 = vadd.f32 %v800, %v736
        %v865 = vadd.f32 %v801, %v737
        %v866 = vadd.f32 %v802, %v738
        %v867 = vadd.f32 %v803, %v739
        %v868 = vadd.f32 %v804, %v740
        %v869 = vadd.f32 %v805, %v741
        %v870 = vadd.f32 %v806, %v742
        %v871 = vadd.f32 %v807, %v743
        %v872 = vadd.f32 %v808, %v744
        %v873 = vadd.f32 %v809, %v745
        %v874 = vadd.f32 %v810, %v746
        %v875 = vadd.f32 %v811, %v747
        %v876 = vadd.f32 %v812, %v748
        %v877 = vadd.f32 %v813, %v749
        %v878 = vadd.f32 %v814, %v750
        %v879 = vadd.f32 %v815, %v751
        %v880 = vadd.f32 %v816, %v752
        %v881 = vadd.f32 %v817, %v753
        %v882 = vadd.f32 %v818, %v754
        %v883 = vadd.f32 %v819, %v755
        %v884 = vadd.f32 %v820, %v756
        %v885 = vadd.f32 %v821, %v757
        %v886 = vadd.f32 %v822, %v758
        %v887 = vadd.f32 %v823, %v759
        %v888 = vadd.f32 %v824, %v760
        %v889 = vadd.f32 %v825, %v761
        %v890 = vadd.f32 %v826, %v762
        %v891 = vadd.f32 %v827, %v763
        %v892 = vadd.f32 %v828, %v764
        %v893 = vadd.f32 %v829, %v765
        %v894 = vadd.f32 %v830, %v766
        %v895 = vadd.f32 %v831, %v767
        %v896 = vadd.f32 %v832, %v768
        %v897 = vadd.f32 %v833, %v769
        %v898 = vadd.f32 %v834, %v770
        %v899 = vadd.f32 %v835, %v771
        %v900 = vadd.f32 %v836, %v772
        %v901 = vadd.f32 %v837, %v773
        %v902 = vadd.f32 %v838, %v774
        %v903 = vadd.f32 %v839, %v775
        %v904 = vadd.f32 %v840, %v776
        %v905 = vadd.f32 %v841, %v777
        %v906 = vadd.f32 %v842, %v778
        %v907 = vadd.f32 %v843, %v779
        %v908 = vadd.f32 %v844, %v780
        %v909 = vadd.f32 %v845, %v781
        %v910 = vadd.f32 %v846, %v782
        %v911 = vadd.f32 %v847, %v783
        %v912 = vadd.f32 %v848, %v784
        %v913 = vadd.f32 %v849, %v785
        %v914 = vadd.f32 %v850, %v786
        %v915 = vadd.f32 %v851, %v787
        %916 = vst [vmem:[#allocation2] sm:$0xff] %v852
        %917 = vst [vmem:[#allocation2 + $0x8] sm:$0xff] %v853
        %918 = vst [vmem:[#allocation2 + $0x10] sm:$0xff] %v854
        %919 = vst [vmem:[#allocation2 + $0x18] sm:$0xff] %v855
        %920 = vst [vmem:[#allocation2 + $0x20] sm:$0xff] %v856
        %921 = vst [vmem:[#allocation2 + $0x28] sm:$0xff] %v857
        %922 = vst [vmem:[#allocation2 + $0x30] sm:$0xff] %v858
        %923 = vst [vmem:[#allocation2 + $0x38] sm:$0xff] %v859
        %924 = vst [vmem:[#allocation2 + $0x40] sm:$0xff] %v860
        %925 = vst [vmem:[#allocation2 + $0x48] sm:$0xff] %v861
        %926 = vst [vmem:[#allocation2 + $0x50] sm:$0xff] %v862
        %927 = vst [vmem:[#allocation2 + $0x58] sm:$0xff] %v863
        %928 = vst [vmem:[#allocation2 + $0x60] sm:$0xff] %v864
        %929 = vst [vmem:[#allocation2 + $0x68] sm:$0xff] %v865
        %930 = vst [vmem:[#allocation2 + $0x70] sm:$0xff] %v866
        %931 = vst [vmem:[#allocation2 + $0x78] sm:$0xff] %v867
        %932 = vst [vmem:[#allocation2 + $0x80] sm:$0xff] %v868
        %933 = vst [vmem:[#allocation2 + $0x88] sm:$0xff] %v869
        %934 = vst [vmem:[#allocation2 + $0x90] sm:$0xff] %v870
        %935 = vst [vmem:[#allocation2 + $0x98] sm:$0xff] %v871
        %936 = vst [vmem:[#allocation2 + $0xa0] sm:$0xff] %v872
        %937 = vst [vmem:[#allocation2 + $0xa8] sm:$0xff] %v873
        %938 = vst [vmem:[#allocation2 + $0xb0] sm:$0xff] %v874
        %939 = vst [vmem:[#allocation2 + $0xb8] sm:$0xff] %v875
        %940 = vst [vmem:[#allocation2 + $0xc0] sm:$0xff] %v876
        %941 = vst [vmem:[#allocation2 + $0xc8] sm:$0xff] %v877
        %942 = vst [vmem:[#allocation2 + $0xd0] sm:$0xff] %v878
        %943 = vst [vmem:[#allocation2 + $0xd8] sm:$0xff] %v879
        %944 = vst [vmem:[#allocation2 + $0xe0] sm:$0xff] %v880
        %945 = vst [vmem:[#allocation2 + $0xe8] sm:$0xff] %v881
        %946 = vst [vmem:[#allocation2 + $0xf0] sm:$0xff] %v882
        %947 = vst [vmem:[#allocation2 + $0xf8] sm:$0xff] %v883
        %948 = vst [vmem:[#allocation2 + $0x100] sm:$0xff] %v884
        %949 = vst [vmem:[#allocation2 + $0x108] sm:$0xff] %v885
        %950 = vst [vmem:[#allocation2 + $0x110] sm:$0xff] %v886
        %951 = vst [vmem:[#allocation2 + $0x118] sm:$0xff] %v887
        %952 = vst [vmem:[#allocation2 + $0x120] sm:$0xff] %v888
        %953 = vst [vmem:[#allocation2 + $0x128] sm:$0xff] %v889
        %954 = vst [vmem:[#allocation2 + $0x130] sm:$0xff] %v890
        %955 = vst [vmem:[#allocation2 + $0x138] sm:$0xff] %v891
        %956 = vst [vmem:[#allocation2 + $0x140] sm:$0xff] %v892
        %957 = vst [vmem:[#allocation2 + $0x148] sm:$0xff] %v893
        %958 = vst [vmem:[#allocation2 + $0x150] sm:$0xff] %v894
        %959 = vst [vmem:[#allocation2 + $0x158] sm:$0xff] %v895
        %960 = vst [vmem:[#allocation2 + $0x160] sm:$0xff] %v896
        %961 = vst [vmem:[#allocation2 + $0x168] sm:$0xff] %v897
        %962 = vst [vmem:[#allocation2 + $0x170] sm:$0xff] %v898
        %963 = vst [vmem:[#allocation2 + $0x178] sm:$0xff] %v899
        %964 = vst [vmem:[#allocation2 + $0x180] sm:$0xff] %v900
        %965 = vst [vmem:[#allocation2 + $0x188] sm:$0xff] %v901
        %966 = vst [vmem:[#allocation2 + $0x190] sm:$0xff] %v902
        %967 = vst [vmem:[#allocation2 + $0x198] sm:$0xff] %v903
        %968 = vst [vmem:[#allocation2 + $0x1a0] sm:$0xff] %v904
        %969 = vst [vmem:[#allocation2 + $0x1a8] sm:$0xff] %v905
        %970 = vst [vmem:[#allocation2 + $0x1b0] sm:$0xff] %v906
        %971 = vst [vmem:[#allocation2 + $0x1b8] sm:$0xff] %v907
        %972 = vst [vmem:[#allocation2 + $0x1c0] sm:$0xff] %v908
        %973 = vst [vmem:[#allocation2 + $0x1c8] sm:$0xff] %v909
        %974 = vst [vmem:[#allocation2 + $0x1d0] sm:$0xff] %v910
        %975 = vst [vmem:[#allocation2 + $0x1d8] sm:$0xff] %v911
        %976 = vst [vmem:[#allocation2 + $0x1e0] sm:$0xff] %v912
        %977 = vst [vmem:[#allocation2 + $0x1e8] sm:$0xff] %v913
        %978 = vst [vmem:[#allocation2 + $0x1f0] sm:$0xff] %v914
        %979 = vst [vmem:[#allocation2 + $0x1f8] sm:$0xff] %v915
        %p980 = scmp.eq.s32.totalorder %s23, 1
        // Predicated region
        $region33: #{tpu_custom_call.1} parent=23 // pred_check
          %p981 = pneg %p980
        $region34: #{tpu_custom_call.1} parent=23 // pred_check_branch
          %983 = sbr.rel (%p981) target = $region36
        $region35: #{tpu_custom_call.1} parent=23 // pred_region
          %v984 = vld [vmem:[#allocation2] sm:$0xff]
          %v985 = vld [vmem:[#allocation2 + $0x8] sm:$0xff]
          %v986 = vld [vmem:[#allocation2 + $0x10] sm:$0xff]
          %v987 = vld [vmem:[#allocation2 + $0x18] sm:$0xff]
          %v988 = vld [vmem:[#allocation2 + $0x20] sm:$0xff]
          %v989 = vld [vmem:[#allocation2 + $0x28] sm:$0xff]
          %v990 = vld [vmem:[#allocation2 + $0x30] sm:$0xff]
          %v991 = vld [vmem:[#allocation2 + $0x38] sm:$0xff]
          %v992 = vld [vmem:[#allocation2 + $0x40] sm:$0xff]
          %v993 = vld [vmem:[#allocation2 + $0x48] sm:$0xff]
          %v994 = vld [vmem:[#allocation2 + $0x50] sm:$0xff]
          %v995 = vld [vmem:[#allocation2 + $0x58] sm:$0xff]
          %v996 = vld [vmem:[#allocation2 + $0x60] sm:$0xff]
          %v997 = vld [vmem:[#allocation2 + $0x68] sm:$0xff]
          %v998 = vld [vmem:[#allocation2 + $0x70] sm:$0xff]
          %v999 = vld [vmem:[#allocation2 + $0x78] sm:$0xff]
          %v1000 = vld [vmem:[#allocation2 + $0x80] sm:$0xff]
          %v1001 = vld [vmem:[#allocation2 + $0x88] sm:$0xff]
          %v1002 = vld [vmem:[#allocation2 + $0x90] sm:$0xff]
          %v1003 = vld [vmem:[#allocation2 + $0x98] sm:$0xff]
          %v1004 = vld [vmem:[#allocation2 + $0xa0] sm:$0xff]
          %v1005 = vld [vmem:[#allocation2 + $0xa8] sm:$0xff]
          %v1006 = vld [vmem:[#allocation2 + $0xb0] sm:$0xff]
          %v1007 = vld [vmem:[#allocation2 + $0xb8] sm:$0xff]
          %v1008 = vld [vmem:[#allocation2 + $0xc0] sm:$0xff]
          %v1009 = vld [vmem:[#allocation2 + $0xc8] sm:$0xff]
          %v1010 = vld [vmem:[#allocation2 + $0xd0] sm:$0xff]
          %v1011 = vld [vmem:[#allocation2 + $0xd8] sm:$0xff]
          %v1012 = vld [vmem:[#allocation2 + $0xe0] sm:$0xff]
          %v1013 = vld [vmem:[#allocation2 + $0xe8] sm:$0xff]
          %v1014 = vld [vmem:[#allocation2 + $0xf0] sm:$0xff]
          %v1015 = vld [vmem:[#allocation2 + $0xf8] sm:$0xff]
          %v1016 = vld [vmem:[#allocation2 + $0x100] sm:$0xff]
          %v1017 = vld [vmem:[#allocation2 + $0x108] sm:$0xff]
          %v1018 = vld [vmem:[#allocation2 + $0x110] sm:$0xff]
          %v1019 = vld [vmem:[#allocation2 + $0x118] sm:$0xff]
          %v1020 = vld [vmem:[#allocation2 + $0x120] sm:$0xff]
          %v1021 = vld [vmem:[#allocation2 + $0x128] sm:$0xff]
          %v1022 = vld [vmem:[#allocation2 + $0x130] sm:$0xff]
          %v1023 = vld [vmem:[#allocation2 + $0x138] sm:$0xff]
          %v1024 = vld [vmem:[#allocation2 + $0x140] sm:$0xff]
          %v1025 = vld [vmem:[#allocation2 + $0x148] sm:$0xff]
          %v1026 = vld [vmem:[#allocation2 + $0x150] sm:$0xff]
          %v1027 = vld [vmem:[#allocation2 + $0x158] sm:$0xff]
          %v1028 = vld [vmem:[#allocation2 + $0x160] sm:$0xff]
          %v1029 = vld [vmem:[#allocation2 + $0x168] sm:$0xff]
          %v1030 = vld [vmem:[#allocation2 + $0x170] sm:$0xff]
          %v1031 = vld [vmem:[#allocation2 + $0x178] sm:$0xff]
          %v1032 = vld [vmem:[#allocation2 + $0x180] sm:$0xff]
          %v1033 = vld [vmem:[#allocation2 + $0x188] sm:$0xff]
          %v1034 = vld [vmem:[#allocation2 + $0x190] sm:$0xff]
          %v1035 = vld [vmem:[#allocation2 + $0x198] sm:$0xff]
          %v1036 = vld [vmem:[#allocation2 + $0x1a0] sm:$0xff]
          %v1037 = vld [vmem:[#allocation2 + $0x1a8] sm:$0xff]
          %v1038 = vld [vmem:[#allocation2 + $0x1b0] sm:$0xff]
          %v1039 = vld [vmem:[#allocation2 + $0x1b8] sm:$0xff]
          %v1040 = vld [vmem:[#allocation2 + $0x1c0] sm:$0xff]
          %v1041 = vld [vmem:[#allocation2 + $0x1c8] sm:$0xff]
          %v1042 = vld [vmem:[#allocation2 + $0x1d0] sm:$0xff]
          %v1043 = vld [vmem:[#allocation2 + $0x1d8] sm:$0xff]
          %v1044 = vld [vmem:[#allocation2 + $0x1e0] sm:$0xff]
          %v1045 = vld [vmem:[#allocation2 + $0x1e8] sm:$0xff]
          %v1046 = vld [vmem:[#allocation2 + $0x1f0] sm:$0xff]
          %v1047 = vld [vmem:[#allocation2 + $0x1f8] sm:$0xff]
          %1048 = vadd.xlane.f32.xlu0 %v984
          %v1049 = vpop.xlane.xlu0 %1048
          %1050 = vadd.xlane.f32.xlu0 %v985
          %v1051 = vpop.xlane.xlu0 %1050
          %1052 = vadd.xlane.f32.xlu0 %v986
          %v1053 = vpop.xlane.xlu0 %1052
          %1054 = vadd.xlane.f32.xlu0 %v987
          %v1055 = vpop.xlane.xlu0 %1054
          %1056 = vadd.xlane.f32.xlu0 %v988
          %v1057 = vpop.xlane.xlu0 %1056
          %1058 = vadd.xlane.f32.xlu0 %v989
          %v1059 = vpop.xlane.xlu0 %1058
          %1060 = vadd.xlane.f32.xlu0 %v990
          %v1061 = vpop.xlane.xlu0 %1060
          %1062 = vadd.xlane.f32.xlu0 %v991
          %v1063 = vpop.xlane.xlu0 %1062
          %1064 = vadd.xlane.f32.xlu0 %v992
          %v1065 = vpop.xlane.xlu0 %1064
          %1066 = vadd.xlane.f32.xlu0 %v993
          %v1067 = vpop.xlane.xlu0 %1066
          %1068 = vadd.xlane.f32.xlu0 %v994
          %v1069 = vpop.xlane.xlu0 %1068
          %1070 = vadd.xlane.f32.xlu0 %v995
          %v1071 = vpop.xlane.xlu0 %1070
          %1072 = vadd.xlane.f32.xlu0 %v996
          %v1073 = vpop.xlane.xlu0 %1072
          %1074 = vadd.xlane.f32.xlu0 %v997
          %v1075 = vpop.xlane.xlu0 %1074
          %1076 = vadd.xlane.f32.xlu0 %v998
          %v1077 = vpop.xlane.xlu0 %1076
          %1078 = vadd.xlane.f32.xlu0 %v999
          %v1079 = vpop.xlane.xlu0 %1078
          %1080 = vadd.xlane.f32.xlu0 %v1000
          %v1081 = vpop.xlane.xlu0 %1080
          %1082 = vadd.xlane.f32.xlu0 %v1001
          %v1083 = vpop.xlane.xlu0 %1082
          %1084 = vadd.xlane.f32.xlu0 %v1002
          %v1085 = vpop.xlane.xlu0 %1084
          %1086 = vadd.xlane.f32.xlu0 %v1003
          %v1087 = vpop.xlane.xlu0 %1086
          %1088 = vadd.xlane.f32.xlu0 %v1004
          %v1089 = vpop.xlane.xlu0 %1088
          %1090 = vadd.xlane.f32.xlu0 %v1005
          %v1091 = vpop.xlane.xlu0 %1090
          %1092 = vadd.xlane.f32.xlu0 %v1006
          %v1093 = vpop.xlane.xlu0 %1092
          %1094 = vadd.xlane.f32.xlu0 %v1007
          %v1095 = vpop.xlane.xlu0 %1094
          %1096 = vadd.xlane.f32.xlu0 %v1008
          %v1097 = vpop.xlane.xlu0 %1096
          %1098 = vadd.xlane.f32.xlu0 %v1009
          %v1099 = vpop.xlane.xlu0 %1098
          %1100 = vadd.xlane.f32.xlu0 %v1010
          %v1101 = vpop.xlane.xlu0 %1100
          %1102 = vadd.xlane.f32.xlu0 %v1011
          %v1103 = vpop.xlane.xlu0 %1102
          %1104 = vadd.xlane.f32.xlu0 %v1012
          %v1105 = vpop.xlane.xlu0 %1104
          %1106 = vadd.xlane.f32.xlu0 %v1013
          %v1107 = vpop.xlane.xlu0 %1106
          %1108 = vadd.xlane.f32.xlu0 %v1014
          %v1109 = vpop.xlane.xlu0 %1108
          %1110 = vadd.xlane.f32.xlu0 %v1015
          %v1111 = vpop.xlane.xlu0 %1110
          %1112 = vadd.xlane.f32.xlu0 %v1016
          %v1113 = vpop.xlane.xlu0 %1112
          %1114 = vadd.xlane.f32.xlu0 %v1017
          %v1115 = vpop.xlane.xlu0 %1114
          %1116 = vadd.xlane.f32.xlu0 %v1018
          %v1117 = vpop.xlane.xlu0 %1116
          %1118 = vadd.xlane.f32.xlu0 %v1019
          %v1119 = vpop.xlane.xlu0 %1118
          %1120 = vadd.xlane.f32.xlu0 %v1020
          %v1121 = vpop.xlane.xlu0 %1120
          %1122 = vadd.xlane.f32.xlu0 %v1021
          %v1123 = vpop.xlane.xlu0 %1122
          %1124 = vadd.xlane.f32.xlu0 %v1022
          %v1125 = vpop.xlane.xlu0 %1124
          %1126 = vadd.xlane.f32.xlu0 %v1023
          %v1127 = vpop.xlane.xlu0 %1126
          %1128 = vadd.xlane.f32.xlu0 %v1024
          %v1129 = vpop.xlane.xlu0 %1128
          %1130 = vadd.xlane.f32.xlu0 %v1025
          %v1131 = vpop.xlane.xlu0 %1130
          %1132 = vadd.xlane.f32.xlu0 %v1026
          %v1133 = vpop.xlane.xlu0 %1132
          %1134 = vadd.xlane.f32.xlu0 %v1027
          %v1135 = vpop.xlane.xlu0 %1134
          %1136 = vadd.xlane.f32.xlu0 %v1028
          %v1137 = vpop.xlane.xlu0 %1136
          %1138 = vadd.xlane.f32.xlu0 %v1029
          %v1139 = vpop.xlane.xlu0 %1138
          %1140 = vadd.xlane.f32.xlu0 %v1030
          %v1141 = vpop.xlane.xlu0 %1140
          %1142 = vadd.xlane.f32.xlu0 %v1031
          %v1143 = vpop.xlane.xlu0 %1142
          %1144 = vadd.xlane.f32.xlu0 %v1032
          %v1145 = vpop.xlane.xlu0 %1144
          %1146 = vadd.xlane.f32.xlu0 %v1033
          %v1147 = vpop.xlane.xlu0 %1146
          %1148 = vadd.xlane.f32.xlu0 %v1034
          %v1149 = vpop.xlane.xlu0 %1148
          %1150 = vadd.xlane.f32.xlu0 %v1035
          %v1151 = vpop.xlane.xlu0 %1150
          %1152 = vadd.xlane.f32.xlu0 %v1036
          %v1153 = vpop.xlane.xlu0 %1152
          %1154 = vadd.xlane.f32.xlu0 %v1037
          %v1155 = vpop.xlane.xlu0 %1154
          %1156 = vadd.xlane.f32.xlu0 %v1038
          %v1157 = vpop.xlane.xlu0 %1156
          %1158 = vadd.xlane.f32.xlu0 %v1039
          %v1159 = vpop.xlane.xlu0 %1158
          %1160 = vadd.xlane.f32.xlu0 %v1040
          %v1161 = vpop.xlane.xlu0 %1160
          %1162 = vadd.xlane.f32.xlu0 %v1041
          %v1163 = vpop.xlane.xlu0 %1162
          %1164 = vadd.xlane.f32.xlu0 %v1042
          %v1165 = vpop.xlane.xlu0 %1164
          %1166 = vadd.xlane.f32.xlu0 %v1043
          %v1167 = vpop.xlane.xlu0 %1166
          %1168 = vadd.xlane.f32.xlu0 %v1044
          %v1169 = vpop.xlane.xlu0 %1168
          %1170 = vadd.xlane.f32.xlu0 %v1045
          %v1171 = vpop.xlane.xlu0 %1170
          %1172 = vadd.xlane.f32.xlu0 %v1046
          %v1173 = vpop.xlane.xlu0 %1172
          %1174 = vadd.xlane.f32.xlu0 %v1047
          %v1175 = vpop.xlane.xlu0 %1174
          %v1240 = vlaneseq
          %v1241 = vshrl.u32 %v1240, 7
          %v1242 = vsub.s32 %v323, %v1241
          %v1243 = vrot.slane %v1049, %v1242
          %v1244 = vadd.s32 %v323, 4294967288
          %v1245 = vlaneseq
          %v1246 = vshrl.u32 %v1245, 7
          %v1247 = vsub.s32 %v1244, %v1246
          %v1248 = vrot.slane %v1051, %v1247
          %vm1249 = vcmask 130112
          %v1250 = vsel %vm1249, %v1248, %v1243
          %v1251 = vadd.s32 %v323, 4294967280
          %v1252 = vlaneseq
          %v1253 = vshrl.u32 %v1252, 7
          %v1254 = vsub.s32 %v1251, %v1253
          %v1255 = vrot.slane %v1053, %v1254
          %vm1256 = vcmask 195712
          %v1257 = vsel %vm1256, %v1255, %v1250
          %v1258 = vadd.s32 %v323, 4294967272
          %v1259 = vlaneseq
          %v1260 = vshrl.u32 %v1259, 7
          %v1261 = vsub.s32 %v1258, %v1260
          %v1262 = vrot.slane %v1055, %v1261
          %vm1263 = vcmask 261312
          %v1264 = vsel %vm1263, %v1262, %v1257
          %v1265 = vadd.s32 %v323, 4294967264
          %v1266 = vlaneseq
          %v1267 = vshrl.u32 %v1266, 7
          %v1268 = vsub.s32 %v1265, %v1267
          %v1269 = vrot.slane %v1057, %v1268
          %vm1270 = vcmask 326912
          %v1271 = vsel %vm1270, %v1269, %v1264
          %v1272 = vadd.s32 %v323, 4294967256
          %v1273 = vlaneseq
          %v1274 = vshrl.u32 %v1273, 7
          %v1275 = vsub.s32 %v1272, %v1274
          %v1276 = vrot.slane %v1059, %v1275
          %vm1277 = vcmask 392512
          %v1278 = vsel %vm1277, %v1276, %v1271
          %v1279 = vadd.s32 %v323, 4294967248
          %v1280 = vlaneseq
          %v1281 = vshrl.u32 %v1280, 7
          %v1282 = vsub.s32 %v1279, %v1281
          %v1283 = vrot.slane %v1061, %v1282
          %vm1284 = vcmask 458112
          %v1285 = vsel %vm1284, %v1283, %v1278
          %v1286 = vadd.s32 %v323, 4294967240
          %v1287 = vlaneseq
          %v1288 = vshrl.u32 %v1287, 7
          %v1289 = vsub.s32 %v1286, %v1288
          %v1290 = vrot.slane %v1063, %v1289
          %vm1291 = vcmask 523712
          %v1292 = vsel %vm1291, %v1290, %v1285
          %v1293 = vadd.s32 %v323, 4294967232
          %v1294 = vlaneseq
          %v1295 = vshrl.u32 %v1294, 7
          %v1296 = vsub.s32 %v1293, %v1295
          %v1297 = vrot.slane %v1065, %v1296
          %vm1298 = vcmask 589312
          %v1299 = vsel %vm1298, %v1297, %v1292
          %v1300 = vadd.s32 %v323, 4294967224
          %v1301 = vlaneseq
          %v1302 = vshrl.u32 %v1301, 7
          %v1303 = vsub.s32 %v1300, %v1302
          %v1304 = vrot.slane %v1067, %v1303
          %vm1305 = vcmask 654912
          %v1306 = vsel %vm1305, %v1304, %v1299
          %v1307 = vadd.s32 %v323, 4294967216
          %v1308 = vlaneseq
          %v1309 = vshrl.u32 %v1308, 7
          %v1310 = vsub.s32 %v1307, %v1309
          %v1311 = vrot.slane %v1069, %v1310
          %vm1312 = vcmask 720512
          %v1313 = vsel %vm1312, %v1311, %v1306
          %v1314 = vadd.s32 %v323, 4294967208
          %v1315 = vlaneseq
          %v1316 = vshrl.u32 %v1315, 7
          %v1317 = vsub.s32 %v1314, %v1316
          %v1318 = vrot.slane %v1071, %v1317
          %vm1319 = vcmask 786112
          %v1320 = vsel %vm1319, %v1318, %v1313
          %v1321 = vadd.s32 %v323, 4294967200
          %v1322 = vlaneseq
          %v1323 = vshrl.u32 %v1322, 7
          %v1324 = vsub.s32 %v1321, %v1323
          %v1325 = vrot.slane %v1073, %v1324
          %vm1326 = vcmask 851712
          %v1327 = vsel %vm1326, %v1325, %v1320
          %v1328 = vadd.s32 %v323, 4294967192
          %v1329 = vlaneseq
          %v1330 = vshrl.u32 %v1329, 7
          %v1331 = vsub.s32 %v1328, %v1330
          %v1332 = vrot.slane %v1075, %v1331
          %vm1333 = vcmask 917312
          %v1334 = vsel %vm1333, %v1332, %v1327
          %v1335 = vadd.s32 %v323, 4294967184
          %v1336 = vlaneseq
          %v1337 = vshrl.u32 %v1336, 7
          %v1338 = vsub.s32 %v1335, %v1337
          %v1339 = vrot.slane %v1077, %v1338
          %vm1340 = vcmask 982912
          %v1341 = vsel %vm1340, %v1339, %v1334
          %v1342 = vadd.s32 %v323, 4294967176
          %v1343 = vlaneseq
          %v1344 = vshrl.u32 %v1343, 7
          %v1345 = vsub.s32 %v1342, %v1344
          %v1346 = vrot.slane %v1079, %v1345
          %vm1347 = vcmask 1048512
          %v1348 = vsel %vm1347, %v1346, %v1341
          %v1349 = vlaneseq
          %v1350 = vshrl.u32 %v1349, 7
          %v1351 = vsub.s32 %v323, %v1350
          %v1352 = vrot.slane %v1081, %v1351
          %v1353 = vlaneseq
          %v1354 = vshrl.u32 %v1353, 7
          %v1355 = vsub.s32 %v1244, %v1354
          %v1356 = vrot.slane %v1083, %v1355
          %v1357 = vsel %vm1249, %v1356, %v1352
          %v1358 = vlaneseq
          %v1359 = vshrl.u32 %v1358, 7
          %v1360 = vsub.s32 %v1251, %v1359
          %v1361 = vrot.slane %v1085, %v1360
          %v1362 = vsel %vm1256, %v1361, %v1357
          %v1363 = vlaneseq
          %v1364 = vshrl.u32 %v1363, 7
          %v1365 = vsub.s32 %v1258, %v1364
          %v1366 = vrot.slane %v1087, %v1365
          %v1367 = vsel %vm1263, %v1366, %v1362
          %v1368 = vlaneseq
          %v1369 = vshrl.u32 %v1368, 7
          %v1370 = vsub.s32 %v1265, %v1369
          %v1371 = vrot.slane %v1089, %v1370
          %v1372 = vsel %vm1270, %v1371, %v1367
          %v1373 = vlaneseq
          %v1374 = vshrl.u32 %v1373, 7
          %v1375 = vsub.s32 %v1272, %v1374
          %v1376 = vrot.slane %v1091, %v1375
          %v1377 = vsel %vm1277, %v1376, %v1372
          %v1378 = vlaneseq
          %v1379 = vshrl.u32 %v1378, 7
          %v1380 = vsub.s32 %v1279, %v1379
          %v1381 = vrot.slane %v1093, %v1380
          %v1382 = vsel %vm1284, %v1381, %v1377
          %v1383 = vlaneseq
          %v1384 = vshrl.u32 %v1383, 7
          %v1385 = vsub.s32 %v1286, %v1384
          %v1386 = vrot.slane %v1095, %v1385
          %v1387 = vsel %vm1291, %v1386, %v1382
          %v1388 = vlaneseq
          %v1389 = vshrl.u32 %v1388, 7
          %v1390 = vsub.s32 %v1293, %v1389
          %v1391 = vrot.slane %v1097, %v1390
          %v1392 = vsel %vm1298, %v1391, %v1387
          %v1393 = vlaneseq
          %v1394 = vshrl.u32 %v1393, 7
          %v1395 = vsub.s32 %v1300, %v1394
          %v1396 = vrot.slane %v1099, %v1395
          %v1397 = vsel %vm1305, %v1396, %v1392
          %v1398 = vlaneseq
          %v1399 = vshrl.u32 %v1398, 7
          %v1400 = vsub.s32 %v1307, %v1399
          %v1401 = vrot.slane %v1101, %v1400
          %v1402 = vsel %vm1312, %v1401, %v1397
          %v1403 = vlaneseq
          %v1404 = vshrl.u32 %v1403, 7
          %v1405 = vsub.s32 %v1314, %v1404
          %v1406 = vrot.slane %v1103, %v1405
          %v1407 = vsel %vm1319, %v1406, %v1402
          %v1408 = vlaneseq
          %v1409 = vshrl.u32 %v1408, 7
          %v1410 = vsub.s32 %v1321, %v1409
          %v1411 = vrot.slane %v1105, %v1410
          %v1412 = vsel %vm1326, %v1411, %v1407
          %v1413 = vlaneseq
          %v1414 = vshrl.u32 %v1413, 7
          %v1415 = vsub.s32 %v1328, %v1414
          %v1416 = vrot.slane %v1107, %v1415
          %v1417 = vsel %vm1333, %v1416, %v1412
          %v1418 = vlaneseq
          %v1419 = vshrl.u32 %v1418, 7
          %v1420 = vsub.s32 %v1335, %v1419
          %v1421 = vrot.slane %v1109, %v1420
          %v1422 = vsel %vm1340, %v1421, %v1417
          %v1423 = vlaneseq
          %v1424 = vshrl.u32 %v1423, 7
          %v1425 = vsub.s32 %v1342, %v1424
          %v1426 = vrot.slane %v1111, %v1425
          %v1427 = vsel %vm1347, %v1426, %v1422
          %v1428 = vlaneseq
          %v1429 = vshrl.u32 %v1428, 7
          %v1430 = vsub.s32 %v323, %v1429
          %v1431 = vrot.slane %v1113, %v1430
          %v1432 = vlaneseq
          %v1433 = vshrl.u32 %v1432, 7
          %v1434 = vsub.s32 %v1244, %v1433
          %v1435 = vrot.slane %v1115, %v1434
          %v1436 = vsel %vm1249, %v1435, %v1431
          %v1437 = vlaneseq
          %v1438 = vshrl.u32 %v1437, 7
          %v1439 = vsub.s32 %v1251, %v1438
          %v1440 = vrot.slane %v1117, %v1439
          %v1441 = vsel %vm1256, %v1440, %v1436
          %v1442 = vlaneseq
          %v1443 = vshrl.u32 %v1442, 7
          %v1444 = vsub.s32 %v1258, %v1443
          %v1445 = vrot.slane %v1119, %v1444
          %v1446 = vsel %vm1263, %v1445, %v1441
          %v1447 = vlaneseq
          %v1448 = vshrl.u32 %v1447, 7
          %v1449 = vsub.s32 %v1265, %v1448
          %v1450 = vrot.slane %v1121, %v1449
          %v1451 = vsel %vm1270, %v1450, %v1446
          %v1452 = vlaneseq
          %v1453 = vshrl.u32 %v1452, 7
          %v1454 = vsub.s32 %v1272, %v1453
          %v1455 = vrot.slane %v1123, %v1454
          %v1456 = vsel %vm1277, %v1455, %v1451
          %v1457 = vlaneseq
          %v1458 = vshrl.u32 %v1457, 7
          %v1459 = vsub.s32 %v1279, %v1458
          %v1460 = vrot.slane %v1125, %v1459
          %v1461 = vsel %vm1284, %v1460, %v1456
          %v1462 = vlaneseq
          %v1463 = vshrl.u32 %v1462, 7
          %v1464 = vsub.s32 %v1286, %v1463
          %v1465 = vrot.slane %v1127, %v1464
          %v1466 = vsel %vm1291, %v1465, %v1461
          %v1467 = vlaneseq
          %v1468 = vshrl.u32 %v1467, 7
          %v1469 = vsub.s32 %v1293, %v1468
          %v1470 = vrot.slane %v1129, %v1469
          %v1471 = vsel %vm1298, %v1470, %v1466
          %v1472 = vlaneseq
          %v1473 = vshrl.u32 %v1472, 7
          %v1474 = vsub.s32 %v1300, %v1473
          %v1475 = vrot.slane %v1131, %v1474
          %v1476 = vsel %vm1305, %v1475, %v1471
          %v1477 = vlaneseq
          %v1478 = vshrl.u32 %v1477, 7
          %v1479 = vsub.s32 %v1307, %v1478
          %v1480 = vrot.slane %v1133, %v1479
          %v1481 = vsel %vm1312, %v1480, %v1476
          %v1482 = vlaneseq
          %v1483 = vshrl.u32 %v1482, 7
          %v1484 = vsub.s32 %v1314, %v1483
          %v1485 = vrot.slane %v1135, %v1484
          %v1486 = vsel %vm1319, %v1485, %v1481
          %v1487 = vlaneseq
          %v1488 = vshrl.u32 %v1487, 7
          %v1489 = vsub.s32 %v1321, %v1488
          %v1490 = vrot.slane %v1137, %v1489
          %v1491 = vsel %vm1326, %v1490, %v1486
          %v1492 = vlaneseq
          %v1493 = vshrl.u32 %v1492, 7
          %v1494 = vsub.s32 %v1328, %v1493
          %v1495 = vrot.slane %v1139, %v1494
          %v1496 = vsel %vm1333, %v1495, %v1491
          %v1497 = vlaneseq
          %v1498 = vshrl.u32 %v1497, 7
          %v1499 = vsub.s32 %v1335, %v1498
          %v1500 = vrot.slane %v1141, %v1499
          %v1501 = vsel %vm1340, %v1500, %v1496
          %v1502 = vlaneseq
          %v1503 = vshrl.u32 %v1502, 7
          %v1504 = vsub.s32 %v1342, %v1503
          %v1505 = vrot.slane %v1143, %v1504
          %v1506 = vsel %vm1347, %v1505, %v1501
          %v1507 = vlaneseq
          %v1508 = vshrl.u32 %v1507, 7
          %v1509 = vsub.s32 %v323, %v1508
          %v1510 = vrot.slane %v1145, %v1509
          %v1511 = vlaneseq
          %v1512 = vshrl.u32 %v1511, 7
          %v1513 = vsub.s32 %v1244, %v1512
          %v1514 = vrot.slane %v1147, %v1513
          %v1515 = vsel %vm1249, %v1514, %v1510
          %v1516 = vlaneseq
          %v1517 = vshrl.u32 %v1516, 7
          %v1518 = vsub.s32 %v1251, %v1517
          %v1519 = vrot.slane %v1149, %v1518
          %v1520 = vsel %vm1256, %v1519, %v1515
          %v1521 = vlaneseq
          %v1522 = vshrl.u32 %v1521, 7
          %v1523 = vsub.s32 %v1258, %v1522
          %v1524 = vrot.slane %v1151, %v1523
          %v1525 = vsel %vm1263, %v1524, %v1520
          %v1526 = vlaneseq
          %v1527 = vshrl.u32 %v1526, 7
          %v1528 = vsub.s32 %v1265, %v1527
          %v1529 = vrot.slane %v1153, %v1528
          %v1530 = vsel %vm1270, %v1529, %v1525
          %v1531 = vlaneseq
          %v1532 = vshrl.u32 %v1531, 7
          %v1533 = vsub.s32 %v1272, %v1532
          %v1534 = vrot.slane %v1155, %v1533
          %v1535 = vsel %vm1277, %v1534, %v1530
          %v1536 = vlaneseq
          %v1537 = vshrl.u32 %v1536, 7
          %v1538 = vsub.s32 %v1279, %v1537
          %v1539 = vrot.slane %v1157, %v1538
          %v1540 = vsel %vm1284, %v1539, %v1535
          %v1541 = vlaneseq
          %v1542 = vshrl.u32 %v1541, 7
          %v1543 = vsub.s32 %v1286, %v1542
          %v1544 = vrot.slane %v1159, %v1543
          %v1545 = vsel %vm1291, %v1544, %v1540
          %v1546 = vlaneseq
          %v1547 = vshrl.u32 %v1546, 7
          %v1548 = vsub.s32 %v1293, %v1547
          %v1549 = vrot.slane %v1161, %v1548
          %v1550 = vsel %vm1298, %v1549, %v1545
          %v1551 = vlaneseq
          %v1552 = vshrl.u32 %v1551, 7
          %v1553 = vsub.s32 %v1300, %v1552
          %v1554 = vrot.slane %v1163, %v1553
          %v1555 = vsel %vm1305, %v1554, %v1550
          %v1556 = vlaneseq
          %v1557 = vshrl.u32 %v1556, 7
          %v1558 = vsub.s32 %v1307, %v1557
          %v1559 = vrot.slane %v1165, %v1558
          %v1560 = vsel %vm1312, %v1559, %v1555
          %v1561 = vlaneseq
          %v1562 = vshrl.u32 %v1561, 7
          %v1563 = vsub.s32 %v1314, %v1562
          %v1564 = vrot.slane %v1167, %v1563
          %v1565 = vsel %vm1319, %v1564, %v1560
          %v1566 = vlaneseq
          %v1567 = vshrl.u32 %v1566, 7
          %v1568 = vsub.s32 %v1321, %v1567
          %v1569 = vrot.slane %v1169, %v1568
          %v1570 = vsel %vm1326, %v1569, %v1565
          %v1571 = vlaneseq
          %v1572 = vshrl.u32 %v1571, 7
          %v1573 = vsub.s32 %v1328, %v1572
          %v1574 = vrot.slane %v1171, %v1573
          %v1575 = vsel %vm1333, %v1574, %v1570
          %v1576 = vlaneseq
          %v1577 = vshrl.u32 %v1576, 7
          %v1578 = vsub.s32 %v1335, %v1577
          %v1579 = vrot.slane %v1173, %v1578
          %v1580 = vsel %vm1340, %v1579, %v1575
          %v1581 = vlaneseq
          %v1582 = vshrl.u32 %v1581, 7
          %v1583 = vsub.s32 %v1342, %v1582
          %v1584 = vrot.slane %v1175, %v1583
          %v1585 = vsel %vm1347, %v1584, %v1580
          %vm1586 = vcmask 1041409
          %v1587 = vsel %vm1586, %v1427, %v1348
          %vm1588 = vcmask 1042434
          %v1589 = vsel %vm1588, %v1506, %v1587
          %vm1590 = vcmask 1043459
          %v1591 = vsel %vm1590, %v1585, %v1589
          %1593 = vst [vmem:[%s184] sm:$0xf] %v1591
        $region36: #{tpu_custom_call.1} parent=23 // pred_fallthru
          _
        %s1594 = sand.u32 %s66, 1
        %s1595 = scalar_lea.sflag [#allocation5], %s1594
        %s1596 = sand.u32 %s66, 1
        %s1597 = smul.addr %s1596, 4
        %s1598 = scalar_lea.vmem [#allocation6], %s1597
        // Predicated region
        $region37: #{tpu_custom_call.1} parent=23 // pred_check
          %p1599 = pneg %p76
        $region38: #{tpu_custom_call.1} parent=23 // pred_check_branch
          %1601 = sbr.rel (%p1599) target = $region40
        $region39: #{tpu_custom_call.1} parent=23 // pred_region
          %s1603 = ssub.s32 64, 64
          %1604 = vsyncadd %s1595, %s1603
          %s1605 = smul.addr %s22, 64
          %s1606 = scalar_lea.hbm %s1, %s1605
          %s1608 = sshll.u32 %s1598, 4
          %s1609 = int_to_ptr.vmem [resolvable:$true] %s1608
          %1611 = dma.vmem_to_hbm [thread:$0]  %s1609, 64, %s1606, %s1595
        $region40: #{tpu_custom_call.1} parent=23 // pred_fallthru
          _
      $region24: #{tpu_custom_call.1} parent=5 // pred_fallthru
        _
      %p1612 = scmp.le.s32.totalorder 2, %s13
      // Predicated region
      $region41: #{tpu_custom_call.1} parent=5 // pred_check
        %p1613 = pneg %p1612
      $region42: #{tpu_custom_call.1} parent=5 // pred_check_branch
        %1615 = sbr.rel (%p1613) target = $region44
      $region43: #{tpu_custom_call.1} parent=5 // pred_region
        %s1616 = ssub.s32 %s13, 2
        // Predicated region
        $region45: #{tpu_custom_call.1} parent=43 // pred_check
          %p1617 = pneg %p82
        $region46: #{tpu_custom_call.1} parent=43 // pred_check_branch
          %1619 = sbr.rel (%p1617) target = $region48
        $region47: #{tpu_custom_call.1} parent=43 // pred_region
          %s1620 = sand.u32 %s67, 1
          %s1621 = scalar_lea.sflag [#allocation5], %s1620
          %s1622 = sand.u32 %s67, 1
          %s1623 = smul.addr %s1622, 4
          %s1624 = scalar_lea.vmem [#allocation6], %s1623
          %1625 = dma.done %s1621, 64
        $region48: #{tpu_custom_call.1} parent=43 // pred_fallthru
          _
      $region44: #{tpu_custom_call.1} parent=5 // pred_fallthru
        _
    $region6: #{tpu_custom_call.1} parent=1 // loop_footer
      %s17 = sadd.s32 1, %s13
    $region7: #{tpu_custom_call.1} parent=1 // loop_footer_branch
      %12 = sbr.rel target = $region3
    $region8: #{tpu_custom_call.1} parent=1 // loop_exit
      _
    %1626 = vsyncpa [#allocation4], 1
    %s1627 = scalar_lea.sflag [#allocation4], 1
    %1628 = vsyncpa %s1627, 1
    %1629 = vsyncpa [#allocation5], 1
    %s1630 = scalar_lea.sflag [#allocation5], 1
    %1631 = vsyncpa %s1630, 1

</llo_original>
